<compile_context>
chip_gen: v7x
topology: tpu7x:2x2x1
jax: 0.10.0
libtpu: 0.0.40
codegen_flags: <defaults>
</compile_context>

<pallas_src>
import functools

import jax
import jax.numpy as jnp
from jax.experimental import pallas as pl
from jax.experimental.pallas import tpu as pltpu

EPS = 1e-6


# ---------------- in-kernel helpers (traced into the Pallas kernel) -------------


def _norm(x, alpha, bias):
    # Matches torch: x.std(-1) uses Bessel correction (N-1); (x-mean)/(std+eps)
    mean = jnp.mean(x, axis=-1, keepdims=True)
    var = jnp.sum((x - mean) ** 2, axis=-1, keepdims=True) / (x.shape[-1] - 1)
    inv = pl.reciprocal(jnp.sqrt(var) + EPS, approx=True)
    return alpha * ((x - mean) * inv) + bias


def _softmax(s):
    m = jnp.max(s, axis=-1, keepdims=True)
    e = jnp.exp(s - m)
    return e * pl.reciprocal(jnp.sum(e, axis=-1, keepdims=True), approx=True)


# ------------------------------- Pallas kernel ----------------------------------


def encoder_layer_kernel(n_heads,
                         # inputs
                         xq_ref, xf_ref,
                         n1a, n1b, n2a, n2b,
                         wq, bq, wkv, bkv, wo, bo,
                         fw1, fb1, fw2, fb2,
                         # outputs
                         out_ref,
                         # scratch
                         k_s, v_s):
    E = out_ref.shape[-1]
    dh = E // n_heads
    scale = 1.0 / float(dh) ** 0.5

    # ---- per-batch prologue (first query tile): norm_1 over full seq + K/V ----
    @pl.when(pl.program_id(1) == 0)
    def _():
        xn = _norm(xf_ref[...], n1a[...], n1b[...]).astype(jnp.bfloat16)   # (S, E)
        kv = jnp.dot(xn, wkv[...], preferred_element_type=jnp.float32) + bkv[...]
        k_s[...] = kv[:, :E].astype(jnp.bfloat16)
        v_s[...] = kv[:, E:].astype(jnp.bfloat16)

    # ---- per query tile ----
    x = xq_ref[...]                                                  # (TS, E) f32
    xn_q = _norm(x, n1a[...], n1b[...]).astype(jnp.bfloat16)
    q = jnp.dot(xn_q, wq[...], preferred_element_type=jnp.float32) + bq[...]
    qb = q.astype(jnp.bfloat16)

    k = k_s[...]                                                     # (S, E) bf16
    v = v_s[...]
    wo_all = wo[...]                                                 # (E, E) bf16

    # self-attention: static head loop, no transposes, per-head out-proj accumulate
    attn = jnp.zeros((x.shape[0], E), jnp.float32)
    for h in range(n_heads):
        lo = h * dh
        qh = qb[:, lo:lo + dh]
        kh = k[:, lo:lo + dh]
        vh = v[:, lo:lo + dh]
        s = jax.lax.dot_general(qh, kh, (((1,), (1,)), ((), ())),
                                preferred_element_type=jnp.float32) * scale
        p = _softmax(s)
        oh = jnp.dot(p.astype(jnp.bfloat16), vh,
                     preferred_element_type=jnp.float32)
        attn = attn + jnp.dot(oh.astype(jnp.bfloat16), wo_all[lo:lo + dh, :],
                              preferred_element_type=jnp.float32)
    attn = attn + bo[...]

    out1 = x + attn                                  # residual to raw x (dropout_1 = id)

    # feed-forward block (residual added to the *normed* tensor, as in the module)
    o_n = _norm(out1, n2a[...], n2b[...])
    ob = o_n.astype(jnp.bfloat16)
    hid = jnp.maximum(
        jnp.dot(ob, fw1[...], preferred_element_type=jnp.float32) + fb1[...], 0.0)
    ffo = jnp.dot(hid.astype(jnp.bfloat16), fw2[...],
                  preferred_element_type=jnp.float32) + fb2[...]
    out_ref[...] = (ffo + o_n).astype(out_ref.dtype)  # dropout_2 = identity


# ------------------------------- host wrapper ------------------------------------


def encoder_layer(x, params, n_heads, ts=None):
    (n1a, n1b, n2a, n2b,
     wq, bq, wk, bk, wv, bv, wo, bo,
     fw1, fb1, fw2, fb2) = params

    B, S, E = x.shape
    if ts is None:
        ts = 128 if (S % 128 == 0) else S
    assert S % ts == 0 and (ts % 8 == 0 or ts == S)

    # host-side weight prep: fuse K|V projection, cast matmul weights to bf16
    wkv = jnp.concatenate([wk, wv], axis=1).astype(jnp.bfloat16)     # (E, 2E)
    bkv = jnp.concatenate([bk, bv], axis=1)                          # (1, 2E) f32
    kparams = [n1a, n1b, n2a, n2b,
               wq.astype(jnp.bfloat16), bq,
               wkv, bkv,
               wo.astype(jnp.bfloat16), bo,
               fw1.astype(jnp.bfloat16), fb1,
               fw2.astype(jnp.bfloat16), fb2]
    weight_specs = [pl.BlockSpec(p.shape, lambda b, s: (0, 0)) for p in kparams]

    kernel = functools.partial(encoder_layer_kernel, n_heads)
    return pl.pallas_call(
        kernel,
        out_shape=jax.ShapeDtypeStruct((B, S, E), jnp.float32),
        grid=(B, S // ts),
        in_specs=[pl.BlockSpec((None, ts, E), lambda b, s: (b, s, 0)),   # query tile
                  pl.BlockSpec((None, S, E), lambda b, s: (b, 0, 0)),    # full seq (K/V)
                  ] + weight_specs,
        out_specs=pl.BlockSpec((None, ts, E), lambda b, s: (b, s, 0)),
        scratch_shapes=[pltpu.VMEM((S, E), jnp.bfloat16),   # K cache (per batch elem)
                        pltpu.VMEM((S, E), jnp.bfloat16)],  # V cache
        compiler_params=pltpu.CompilerParams(
            dimension_semantics=("parallel", "arbitrary"),
            vmem_limit_bytes=48 * 1024 * 1024),
    )(x, x, *kparams)


# ------------------------------ pure-JAX reference -------------------------------


def ref_encoder_layer(x, params, n_heads):
    (n1a, n1b, n2a, n2b,
     wq, bq, wk, bk, wv, bv, wo, bo,
     fw1, fb1, fw2, fb2) = params

    def norm(t, a, b):
        mean = jnp.mean(t, -1, keepdims=True)
        std = jnp.sqrt(jnp.sum((t - mean) ** 2, -1, keepdims=True) / (t.shape[-1] - 1))
        return a * ((t - mean) / (std + EPS)) + b

    def mha(q_in, kv_in):
        B, Sq, E = q_in.shape
        Sk = kv_in.shape[1]
        dh = E // n_heads
        q = (q_in @ wq + bq).reshape(B, Sq, n_heads, dh).transpose(0, 2, 1, 3)
        k = (kv_in @ wk + bk).reshape(B, Sk, n_heads, dh).transpose(0, 2, 1, 3)
        v = (kv_in @ wv + bv).reshape(B, Sk, n_heads, dh).transpose(0, 2, 1, 3)
        s = jnp.einsum('bhqd,bhkd->bhqk', q, k) / jnp.sqrt(jnp.float32(dh))
        p = jax.nn.softmax(s, -1)
        o = jnp.einsum('bhqk,bhkd->bhqd', p, v).transpose(0, 2, 1, 3).reshape(B, Sq, E)
        return o @ wo + bo

    _x = norm(x, n1a, n1b)
    out = x + mha(_x, _x)
    _out = norm(out, n2a, n2b)
    out = jnp.maximum(_out @ fw1 + fb1, 0.0) @ fw2 + fb2 + _out
    return out


# ------------------------------------ main ---------------------------------------


def make_params(key, embed_dim, ff_dim):
    ks = jax.random.split(key, 12)
    i = iter(range(12))

    def lin(kw, kb, fan_in, fan_out, scale=0.05):
        w = jax.random.normal(kw, (fan_in, fan_out), jnp.float32) * scale
        b = jax.random.normal(kb, (1, fan_out), jnp.float32) * scale
        return w, b

    params = []
    # norm_1 / norm_2 : alpha = ones, bias = zeros
    for _ in range(2):
        params += [jnp.ones((1, embed_dim), jnp.float32),
                   jnp.zeros((1, embed_dim), jnp.float32)]
    # attn : q, k, v, out linears (pre-transposed to (in, out))
    for _ in range(4):
        w, b = lin(ks[next(i)], ks[next(i)], embed_dim, embed_dim)
        params += [w, b]
    # feed-forward
    w1, b1 = lin(ks[next(i)], ks[next(i)], embed_dim, ff_dim)
    w2, b2 = lin(ks[next(i)], ks[next(i)], ff_dim, embed_dim)
    params += [w1, b1, w2, b2]
    return params


if __name__ == "__main__":
    B, S, E, H, FF = 2, 16, 32, 4, 64   # batch, seq, embed, heads, ff
    TS = 8                              # query tile (grid = (B, S // TS))
    key = jax.random.PRNGKey(0)
    kx, kp = jax.random.split(key)
    x = jax.random.normal(kx, (B, S, E), jnp.float32)
    params = make_params(kp, E, FF)

    out = encoder_layer(x, params, H, ts=TS)
    out = jax.block_until_ready(out)

    ref = ref_encoder_layer(x, params, H)
    assert out.shape == (B, S, E)
    err = jnp.max(jnp.abs(out - ref))
    assert jnp.allclose(out, ref, atol=2e-2, rtol=2e-2), f"max abs err {err}"

    print("KERNEL_OK")
</pallas_src>

<mosaic_0001>
module attributes {stable_mosaic.version = 11 : i64} {
  func.func @encoder_layer_kernel(%arg0: i32, %arg1: i32, %arg2: memref<1x8x32xf32, #tpu.memory_space<vmem>>, %arg3: memref<1x16x32xf32, #tpu.memory_space<vmem>>, %arg4: memref<1x32xf32, #tpu.memory_space<vmem>>, %arg5: memref<1x32xf32, #tpu.memory_space<vmem>>, %arg6: memref<1x32xf32, #tpu.memory_space<vmem>>, %arg7: memref<1x32xf32, #tpu.memory_space<vmem>>, %arg8: memref<32x32xbf16, #tpu.memory_space<vmem>>, %arg9: memref<1x32xf32, #tpu.memory_space<vmem>>, %arg10: memref<32x64xbf16, #tpu.memory_space<vmem>>, %arg11: memref<1x64xf32, #tpu.memory_space<vmem>>, %arg12: memref<32x32xbf16, #tpu.memory_space<vmem>>, %arg13: memref<1x32xf32, #tpu.memory_space<vmem>>, %arg14: memref<32x64xbf16, #tpu.memory_space<vmem>>, %arg15: memref<1x64xf32, #tpu.memory_space<vmem>>, %arg16: memref<64x32xbf16, #tpu.memory_space<vmem>>, %arg17: memref<1x32xf32, #tpu.memory_space<vmem>>, %arg18: memref<1x8x32xf32, #tpu.memory_space<vmem>>, %arg19: memref<16x32xbf16, #tpu.memory_space<vmem>>, %arg20: memref<16x32xbf16, #tpu.memory_space<vmem>>) attributes {dimension_semantics = [#tpu.dimension_semantics<parallel>, #tpu.dimension_semantics<arbitrary>], iteration_bounds = array<i64: 2, 2>, scalar_prefetch = 0 : i64, scratch_operands = 2 : i64, tpu.core_type = #tpu.core_type<tc>, window_params = [{transform_indices = @transform_0, window_bounds = array<i64: 1, 8, 32>}, {transform_indices = @transform_1, window_bounds = array<i64: 1, 16, 32>}, {pipeline_mode = #tpu.pipeline_mode<synchronous>, transform_indices = @transform_2, window_bounds = array<i64: 1, 32>}, {pipeline_mode = #tpu.pipeline_mode<synchronous>, transform_indices = @transform_3, window_bounds = array<i64: 1, 32>}, {pipeline_mode = #tpu.pipeline_mode<synchronous>, transform_indices = @transform_4, window_bounds = array<i64: 1, 32>}, {pipeline_mode = #tpu.pipeline_mode<synchronous>, transform_indices = @transform_5, window_bounds = array<i64: 1, 32>}, {pipeline_mode = #tpu.pipeline_mode<synchronous>, transform_indices = @transform_6, window_bounds = array<i64: 32, 32>}, {pipeline_mode = #tpu.pipeline_mode<synchronous>, transform_indices = @transform_7, window_bounds = array<i64: 1, 32>}, {pipeline_mode = #tpu.pipeline_mode<synchronous>, transform_indices = @transform_8, window_bounds = array<i64: 32, 64>}, {pipeline_mode = #tpu.pipeline_mode<synchronous>, transform_indices = @transform_9, window_bounds = array<i64: 1, 64>}, {pipeline_mode = #tpu.pipeline_mode<synchronous>, transform_indices = @transform_10, window_bounds = array<i64: 32, 32>}, {pipeline_mode = #tpu.pipeline_mode<synchronous>, transform_indices = @transform_11, window_bounds = array<i64: 1, 32>}, {pipeline_mode = #tpu.pipeline_mode<synchronous>, transform_indices = @transform_12, window_bounds = array<i64: 32, 64>}, {pipeline_mode = #tpu.pipeline_mode<synchronous>, transform_indices = @transform_13, window_bounds = array<i64: 1, 64>}, {pipeline_mode = #tpu.pipeline_mode<synchronous>, transform_indices = @transform_14, window_bounds = array<i64: 64, 32>}, {pipeline_mode = #tpu.pipeline_mode<synchronous>, transform_indices = @transform_15, window_bounds = array<i64: 1, 32>}, {transform_indices = @transform_16, window_bounds = array<i64: 1, 8, 32>}]} {
    %c0_i32 = arith.constant 0 : i32
    %0 = arith.cmpi eq, %arg1, %c0_i32 : i32
    %1 = arith.extui %0 : i1 to i32
    %c0_i32_0 = arith.constant 0 : i32
    %2 = arith.cmpi ne, %1, %c0_i32_0 : i32
    scf.if %2 {
      %c0_72 = arith.constant 0 : index
      %c0_73 = arith.constant 0 : index
      %c0_74 = arith.constant 0 : index
      %176 = vector.load %arg3[%c0_72, %c0_73, %c0_74] : memref<1x16x32xf32, #tpu.memory_space<vmem>>, vector<1x16x32xf32>
      %177 = vector.shape_cast %176 : vector<1x16x32xf32> to vector<16x32xf32>
      %c0_75 = arith.constant 0 : index
      %c0_76 = arith.constant 0 : index
      %178 = vector.load %arg4[%c0_75, %c0_76] : memref<1x32xf32, #tpu.memory_space<vmem>>, vector<1x32xf32>
      %c0_77 = arith.constant 0 : index
      %c0_78 = arith.constant 0 : index
      %179 = vector.load %arg5[%c0_77, %c0_78] : memref<1x32xf32, #tpu.memory_space<vmem>>, vector<1x32xf32>
      %cst_79 = arith.constant dense<0.000000e+00> : vector<16xf32>
      %180 = vector.multi_reduction <add>, %177, %cst_79 [1] : vector<16x32xf32> to vector<16xf32>
      %181 = vector.shape_cast %180 : vector<16xf32> to vector<16x1xf32>
      %cst_80 = arith.constant 3.200000e+01 : f32
      %182 = vector.broadcast %cst_80 : f32 to vector<16x1xf32>
      %183 = arith.divf %181, %182 : vector<16x1xf32>
      %184 = vector.broadcast %183 : vector<16x1xf32> to vector<16x32xf32>
      %185 = arith.subf %177, %184 : vector<16x32xf32>
      %186 = arith.mulf %185, %185 : vector<16x32xf32>
      %cst_81 = arith.constant dense<0.000000e+00> : vector<16xf32>
      %187 = vector.multi_reduction <add>, %186, %cst_81 [1] : vector<16x32xf32> to vector<16xf32>
      %188 = vector.shape_cast %187 : vector<16xf32> to vector<16x1xf32>
      %cst_82 = arith.constant 3.100000e+01 : f32
      %189 = vector.broadcast %cst_82 : f32 to vector<16x1xf32>
      %190 = arith.divf %188, %189 : vector<16x1xf32>
      %191 = math.sqrt %190 : vector<16x1xf32>
      %cst_83 = arith.constant 9.99999997E-7 : f32
      %192 = vector.broadcast %cst_83 : f32 to vector<16x1xf32>
      %193 = arith.addf %191, %192 : vector<16x1xf32>
      %194 = tpu.reciprocal %193 {approx = true} : vector<16x1xf32> -> vector<16x1xf32>
      %195 = vector.broadcast %183 : vector<16x1xf32> to vector<16x32xf32>
      %196 = arith.subf %177, %195 : vector<16x32xf32>
      %197 = vector.broadcast %194 : vector<16x1xf32> to vector<16x32xf32>
      %198 = arith.mulf %196, %197 : vector<16x32xf32>
      %199 = vector.broadcast %178 : vector<1x32xf32> to vector<16x32xf32>
      %200 = arith.mulf %199, %198 : vector<16x32xf32>
      %201 = vector.broadcast %179 : vector<1x32xf32> to vector<16x32xf32>
      %202 = arith.addf %200, %201 : vector<16x32xf32>
      %203 = arith.truncf %202 : vector<16x32xf32> to vector<16x32xbf16>
      %c0_84 = arith.constant 0 : index
      %c0_85 = arith.constant 0 : index
      %204 = vector.load %arg10[%c0_84, %c0_85] : memref<32x64xbf16, #tpu.memory_space<vmem>>, vector<32x64xbf16>
      %cst_86 = arith.constant dense<0.000000e+00> : vector<16x64xf32>
      %205 = tpu.matmul %203, %204, %cst_86 {dimension_numbers = #tpu.dot_dimension_numbers<[1], [0], [0], [1], [0, 0, 1, 1], [], []>} : vector<16x32xbf16>, vector<32x64xbf16>, vector<16x64xf32> -> vector<16x64xf32>
      %c0_87 = arith.constant 0 : index
      %c0_88 = arith.constant 0 : index
      %206 = vector.load %arg11[%c0_87, %c0_88] : memref<1x64xf32, #tpu.memory_space<vmem>>, vector<1x64xf32>
      %207 = vector.broadcast %206 : vector<1x64xf32> to vector<16x64xf32>
      %208 = arith.addf %205, %207 : vector<16x64xf32>
      %209 = vector.extract_strided_slice %208 {offsets = [0, 0], sizes = [16, 32], strides = [1, 1]} : vector<16x64xf32> to vector<16x32xf32>
      %210 = arith.truncf %209 : vector<16x32xf32> to vector<16x32xbf16>
      %c0_89 = arith.constant 0 : index
      %c0_90 = arith.constant 0 : index
      %211 = vector.load %arg19[%c0_89, %c0_90] : memref<16x32xbf16, #tpu.memory_space<vmem>>, vector<16x32xbf16>
      tpu.vector_store %arg19[%c0_89, %c0_90], %210 {strides = array<i32>} : memref<16x32xbf16, #tpu.memory_space<vmem>>, vector<16x32xbf16>,
      %212 = vector.extract_strided_slice %208 {offsets = [0, 32], sizes = [16, 32], strides = [1, 1]} : vector<16x64xf32> to vector<16x32xf32>
      %213 = arith.truncf %212 : vector<16x32xf32> to vector<16x32xbf16>
      %c0_91 = arith.constant 0 : index
      %c0_92 = arith.constant 0 : index
      %214 = vector.load %arg20[%c0_91, %c0_92] : memref<16x32xbf16, #tpu.memory_space<vmem>>, vector<16x32xbf16>
      tpu.vector_store %arg20[%c0_91, %c0_92], %213 {strides = array<i32>} : memref<16x32xbf16, #tpu.memory_space<vmem>>, vector<16x32xbf16>,
    } else {
    }
    %c0 = arith.constant 0 : index
    %c0_1 = arith.constant 0 : index
    %c0_2 = arith.constant 0 : index
    %3 = vector.load %arg2[%c0, %c0_1, %c0_2] : memref<1x8x32xf32, #tpu.memory_space<vmem>>, vector<1x8x32xf32>
    %4 = vector.shape_cast %3 : vector<1x8x32xf32> to vector<8x32xf32>
    %c0_3 = arith.constant 0 : index
    %c0_4 = arith.constant 0 : index
    %5 = vector.load %arg4[%c0_3, %c0_4] : memref<1x32xf32, #tpu.memory_space<vmem>>, vector<1x32xf32>
    %c0_5 = arith.constant 0 : index
    %c0_6 = arith.constant 0 : index
    %6 = vector.load %arg5[%c0_5, %c0_6] : memref<1x32xf32, #tpu.memory_space<vmem>>, vector<1x32xf32>
    %cst = arith.constant dense<0.000000e+00> : vector<8xf32>
    %7 = vector.multi_reduction <add>, %4, %cst [1] : vector<8x32xf32> to vector<8xf32>
    %8 = vector.shape_cast %7 : vector<8xf32> to vector<8x1xf32>
    %cst_7 = arith.constant 3.200000e+01 : f32
    %9 = vector.broadcast %cst_7 : f32 to vector<8x1xf32>
    %10 = arith.divf %8, %9 : vector<8x1xf32>
    %11 = vector.broadcast %10 : vector<8x1xf32> to vector<8x32xf32>
    %12 = arith.subf %4, %11 : vector<8x32xf32>
    %13 = arith.mulf %12, %12 : vector<8x32xf32>
    %cst_8 = arith.constant dense<0.000000e+00> : vector<8xf32>
    %14 = vector.multi_reduction <add>, %13, %cst_8 [1] : vector<8x32xf32> to vector<8xf32>
    %15 = vector.shape_cast %14 : vector<8xf32> to vector<8x1xf32>
    %cst_9 = arith.constant 3.100000e+01 : f32
    %16 = vector.broadcast %cst_9 : f32 to vector<8x1xf32>
    %17 = arith.divf %15, %16 : vector<8x1xf32>
    %18 = math.sqrt %17 : vector<8x1xf32>
    %cst_10 = arith.constant 9.99999997E-7 : f32
    %19 = vector.broadcast %cst_10 : f32 to vector<8x1xf32>
    %20 = arith.addf %18, %19 : vector<8x1xf32>
    %21 = tpu.reciprocal %20 {approx = true} : vector<8x1xf32> -> vector<8x1xf32>
    %22 = vector.broadcast %10 : vector<8x1xf32> to vector<8x32xf32>
    %23 = arith.subf %4, %22 : vector<8x32xf32>
    %24 = vector.broadcast %21 : vector<8x1xf32> to vector<8x32xf32>
    %25 = arith.mulf %23, %24 : vector<8x32xf32>
    %26 = vector.broadcast %5 : vector<1x32xf32> to vector<8x32xf32>
    %27 = arith.mulf %26, %25 : vector<8x32xf32>
    %28 = vector.broadcast %6 : vector<1x32xf32> to vector<8x32xf32>
    %29 = arith.addf %27, %28 : vector<8x32xf32>
    %30 = arith.truncf %29 : vector<8x32xf32> to vector<8x32xbf16>
    %c0_11 = arith.constant 0 : index
    %c0_12 = arith.constant 0 : index
    %31 = vector.load %arg8[%c0_11, %c0_12] : memref<32x32xbf16, #tpu.memory_space<vmem>>, vector<32x32xbf16>
    %cst_13 = arith.constant dense<0.000000e+00> : vector<8x32xf32>
    %32 = tpu.matmul %30, %31, %cst_13 {dimension_numbers = #tpu.dot_dimension_numbers<[1], [0], [0], [1], [0, 0, 1, 1], [], []>} : vector<8x32xbf16>, vector<32x32xbf16>, vector<8x32xf32> -> vector<8x32xf32>
    %c0_14 = arith.constant 0 : index
    %c0_15 = arith.constant 0 : index
    %33 = vector.load %arg9[%c0_14, %c0_15] : memref<1x32xf32, #tpu.memory_space<vmem>>, vector<1x32xf32>
    %34 = vector.broadcast %33 : vector<1x32xf32> to vector<8x32xf32>
    %35 = arith.addf %32, %34 : vector<8x32xf32>
    %36 = arith.truncf %35 : vector<8x32xf32> to vector<8x32xbf16>
    %c0_16 = arith.constant 0 : index
    %c0_17 = arith.constant 0 : index
    %37 = vector.load %arg19[%c0_16, %c0_17] : memref<16x32xbf16, #tpu.memory_space<vmem>>, vector<16x32xbf16>
    %c0_18 = arith.constant 0 : index
    %c0_19 = arith.constant 0 : index
    %38 = vector.load %arg20[%c0_18, %c0_19] : memref<16x32xbf16, #tpu.memory_space<vmem>>, vector<16x32xbf16>
    %c0_20 = arith.constant 0 : index
    %c0_21 = arith.constant 0 : index
    %39 = vector.load %arg12[%c0_20, %c0_21] : memref<32x32xbf16, #tpu.memory_space<vmem>>, vector<32x32xbf16>
    %cst_22 = arith.constant 0.000000e+00 : f32
    %40 = vector.broadcast %cst_22 : f32 to vector<8x32xf32>
    %41 = vector.extract_strided_slice %36 {offsets = [0, 0], sizes = [8, 8], strides = [1, 1]} : vector<8x32xbf16> to vector<8x8xbf16>
    %42 = vector.extract_strided_slice %37 {offsets = [0, 0], sizes = [16, 8], strides = [1, 1]} : vector<16x32xbf16> to vector<16x8xbf16>
    %43 = vector.extract_strided_slice %38 {offsets = [0, 0], sizes = [16, 8], strides = [1, 1]} : vector<16x32xbf16> to vector<16x8xbf16>
    %cst_23 = arith.constant dense<0.000000e+00> : vector<8x16xf32>
    %44 = tpu.matmul %41, %42, %cst_23 {dimension_numbers = #tpu.dot_dimension_numbers<[1], [1], [0], [0], [0, 0, 1, 0], [], []>} : vector<8x8xbf16>, vector<16x8xbf16>, vector<8x16xf32> -> vector<8x16xf32>
    %cst_24 = arith.constant 0.353553385 : f32
    %45 = vector.broadcast %cst_24 : f32 to vector<8x16xf32>
    %46 = arith.mulf %44, %45 : vector<8x16xf32>
    %cst_25 = arith.constant dense<0xFF800000> : vector<8xf32>
    %47 = vector.multi_reduction <maximumf>, %46, %cst_25 [1] : vector<8x16xf32> to vector<8xf32>
    %48 = vector.shape_cast %47 : vector<8xf32> to vector<8x1xf32>
    %49 = vector.broadcast %48 : vector<8x1xf32> to vector<8x16xf32>
    %50 = arith.subf %46, %49 : vector<8x16xf32>
    %51 = math.exp %50 : vector<8x16xf32>
    %cst_26 = arith.constant dense<0.000000e+00> : vector<8xf32>
    %52 = vector.multi_reduction <add>, %51, %cst_26 [1] : vector<8x16xf32> to vector<8xf32>
    %53 = vector.shape_cast %52 : vector<8xf32> to vector<8x1xf32>
    %54 = tpu.reciprocal %53 {approx = true} : vector<8x1xf32> -> vector<8x1xf32>
    %55 = vector.broadcast %54 : vector<8x1xf32> to vector<8x16xf32>
    %56 = arith.mulf %51, %55 : vector<8x16xf32>
    %57 = arith.truncf %56 : vector<8x16xf32> to vector<8x16xbf16>
    %cst_27 = arith.constant dense<0.000000e+00> : vector<8x8xf32>
    %58 = tpu.matmul %57, %43, %cst_27 {dimension_numbers = #tpu.dot_dimension_numbers<[1], [0], [0], [1], [0, 0, 1, 1], [], []>} : vector<8x16xbf16>, vector<16x8xbf16>, vector<8x8xf32> -> vector<8x8xf32>
    %59 = arith.truncf %58 : vector<8x8xf32> to vector<8x8xbf16>
    %60 = vector.extract_strided_slice %39 {offsets = [0, 0], sizes = [8, 32], strides = [1, 1]} : vector<32x32xbf16> to vector<8x32xbf16>
    %cst_28 = arith.constant dense<0.000000e+00> : vector<8x32xf32>
    %61 = tpu.matmul %59, %60, %cst_28 {dimension_numbers = #tpu.dot_dimension_numbers<[1], [0], [0], [1], [0, 0, 1, 1], [], []>} : vector<8x8xbf16>, vector<8x32xbf16>, vector<8x32xf32> -> vector<8x32xf32>
    %62 = arith.addf %40, %61 : vector<8x32xf32>
    %63 = vector.extract_strided_slice %36 {offsets = [0, 8], sizes = [8, 8], strides = [1, 1]} : vector<8x32xbf16> to vector<8x8xbf16>
    %64 = vector.extract_strided_slice %37 {offsets = [0, 8], sizes = [16, 8], strides = [1, 1]} : vector<16x32xbf16> to vector<16x8xbf16>
    %65 = vector.extract_strided_slice %38 {offsets = [0, 8], sizes = [16, 8], strides = [1, 1]} : vector<16x32xbf16> to vector<16x8xbf16>
    %cst_29 = arith.constant dense<0.000000e+00> : vector<8x16xf32>
    %66 = tpu.matmul %63, %64, %cst_29 {dimension_numbers = #tpu.dot_dimension_numbers<[1], [1], [0], [0], [0, 0, 1, 0], [], []>} : vector<8x8xbf16>, vector<16x8xbf16>, vector<8x16xf32> -> vector<8x16xf32>
    %cst_30 = arith.constant 0.353553385 : f32
    %67 = vector.broadcast %cst_30 : f32 to vector<8x16xf32>
    %68 = arith.mulf %66, %67 : vector<8x16xf32>
    %cst_31 = arith.constant dense<0xFF800000> : vector<8xf32>
    %69 = vector.multi_reduction <maximumf>, %68, %cst_31 [1] : vector<8x16xf32> to vector<8xf32>
    %70 = vector.shape_cast %69 : vector<8xf32> to vector<8x1xf32>
    %71 = vector.broadcast %70 : vector<8x1xf32> to vector<8x16xf32>
    %72 = arith.subf %68, %71 : vector<8x16xf32>
    %73 = math.exp %72 : vector<8x16xf32>
    %cst_32 = arith.constant dense<0.000000e+00> : vector<8xf32>
    %74 = vector.multi_reduction <add>, %73, %cst_32 [1] : vector<8x16xf32> to vector<8xf32>
    %75 = vector.shape_cast %74 : vector<8xf32> to vector<8x1xf32>
    %76 = tpu.reciprocal %75 {approx = true} : vector<8x1xf32> -> vector<8x1xf32>
    %77 = vector.broadcast %76 : vector<8x1xf32> to vector<8x16xf32>
    %78 = arith.mulf %73, %77 : vector<8x16xf32>
    %79 = arith.truncf %78 : vector<8x16xf32> to vector<8x16xbf16>
    %cst_33 = arith.constant dense<0.000000e+00> : vector<8x8xf32>
    %80 = tpu.matmul %79, %65, %cst_33 {dimension_numbers = #tpu.dot_dimension_numbers<[1], [0], [0], [1], [0, 0, 1, 1], [], []>} : vector<8x16xbf16>, vector<16x8xbf16>, vector<8x8xf32> -> vector<8x8xf32>
    %81 = arith.truncf %80 : vector<8x8xf32> to vector<8x8xbf16>
    %82 = vector.extract_strided_slice %39 {offsets = [8, 0], sizes = [8, 32], strides = [1, 1]} : vector<32x32xbf16> to vector<8x32xbf16>
    %cst_34 = arith.constant dense<0.000000e+00> : vector<8x32xf32>
    %83 = tpu.matmul %81, %82, %cst_34 {dimension_numbers = #tpu.dot_dimension_numbers<[1], [0], [0], [1], [0, 0, 1, 1], [], []>} : vector<8x8xbf16>, vector<8x32xbf16>, vector<8x32xf32> -> vector<8x32xf32>
    %84 = arith.addf %62, %83 : vector<8x32xf32>
    %85 = vector.extract_strided_slice %36 {offsets = [0, 16], sizes = [8, 8], strides = [1, 1]} : vector<8x32xbf16> to vector<8x8xbf16>
    %86 = vector.extract_strided_slice %37 {offsets = [0, 16], sizes = [16, 8], strides = [1, 1]} : vector<16x32xbf16> to vector<16x8xbf16>
    %87 = vector.extract_strided_slice %38 {offsets = [0, 16], sizes = [16, 8], strides = [1, 1]} : vector<16x32xbf16> to vector<16x8xbf16>
    %cst_35 = arith.constant dense<0.000000e+00> : vector<8x16xf32>
    %88 = tpu.matmul %85, %86, %cst_35 {dimension_numbers = #tpu.dot_dimension_numbers<[1], [1], [0], [0], [0, 0, 1, 0], [], []>} : vector<8x8xbf16>, vector<16x8xbf16>, vector<8x16xf32> -> vector<8x16xf32>
    %cst_36 = arith.constant 0.353553385 : f32
    %89 = vector.broadcast %cst_36 : f32 to vector<8x16xf32>
    %90 = arith.mulf %88, %89 : vector<8x16xf32>
    %cst_37 = arith.constant dense<0xFF800000> : vector<8xf32>
    %91 = vector.multi_reduction <maximumf>, %90, %cst_37 [1] : vector<8x16xf32> to vector<8xf32>
    %92 = vector.shape_cast %91 : vector<8xf32> to vector<8x1xf32>
    %93 = vector.broadcast %92 : vector<8x1xf32> to vector<8x16xf32>
    %94 = arith.subf %90, %93 : vector<8x16xf32>
    %95 = math.exp %94 : vector<8x16xf32>
    %cst_38 = arith.constant dense<0.000000e+00> : vector<8xf32>
    %96 = vector.multi_reduction <add>, %95, %cst_38 [1] : vector<8x16xf32> to vector<8xf32>
    %97 = vector.shape_cast %96 : vector<8xf32> to vector<8x1xf32>
    %98 = tpu.reciprocal %97 {approx = true} : vector<8x1xf32> -> vector<8x1xf32>
    %99 = vector.broadcast %98 : vector<8x1xf32> to vector<8x16xf32>
    %100 = arith.mulf %95, %99 : vector<8x16xf32>
    %101 = arith.truncf %100 : vector<8x16xf32> to vector<8x16xbf16>
    %cst_39 = arith.constant dense<0.000000e+00> : vector<8x8xf32>
    %102 = tpu.matmul %101, %87, %cst_39 {dimension_numbers = #tpu.dot_dimension_numbers<[1], [0], [0], [1], [0, 0, 1, 1], [], []>} : vector<8x16xbf16>, vector<16x8xbf16>, vector<8x8xf32> -> vector<8x8xf32>
    %103 = arith.truncf %102 : vector<8x8xf32> to vector<8x8xbf16>
    %104 = vector.extract_strided_slice %39 {offsets = [16, 0], sizes = [8, 32], strides = [1, 1]} : vector<32x32xbf16> to vector<8x32xbf16>
    %cst_40 = arith.constant dense<0.000000e+00> : vector<8x32xf32>
    %105 = tpu.matmul %103, %104, %cst_40 {dimension_numbers = #tpu.dot_dimension_numbers<[1], [0], [0], [1], [0, 0, 1, 1], [], []>} : vector<8x8xbf16>, vector<8x32xbf16>, vector<8x32xf32> -> vector<8x32xf32>
    %106 = arith.addf %84, %105 : vector<8x32xf32>
    %107 = vector.extract_strided_slice %36 {offsets = [0, 24], sizes = [8, 8], strides = [1, 1]} : vector<8x32xbf16> to vector<8x8xbf16>
    %108 = vector.extract_strided_slice %37 {offsets = [0, 24], sizes = [16, 8], strides = [1, 1]} : vector<16x32xbf16> to vector<16x8xbf16>
    %109 = vector.extract_strided_slice %38 {offsets = [0, 24], sizes = [16, 8], strides = [1, 1]} : vector<16x32xbf16> to vector<16x8xbf16>
    %cst_41 = arith.constant dense<0.000000e+00> : vector<8x16xf32>
    %110 = tpu.matmul %107, %108, %cst_41 {dimension_numbers = #tpu.dot_dimension_numbers<[1], [1], [0], [0], [0, 0, 1, 0], [], []>} : vector<8x8xbf16>, vector<16x8xbf16>, vector<8x16xf32> -> vector<8x16xf32>
    %cst_42 = arith.constant 0.353553385 : f32
    %111 = vector.broadcast %cst_42 : f32 to vector<8x16xf32>
    %112 = arith.mulf %110, %111 : vector<8x16xf32>
    %cst_43 = arith.constant dense<0xFF800000> : vector<8xf32>
    %113 = vector.multi_reduction <maximumf>, %112, %cst_43 [1] : vector<8x16xf32> to vector<8xf32>
    %114 = vector.shape_cast %113 : vector<8xf32> to vector<8x1xf32>
    %115 = vector.broadcast %114 : vector<8x1xf32> to vector<8x16xf32>
    %116 = arith.subf %112, %115 : vector<8x16xf32>
    %117 = math.exp %116 : vector<8x16xf32>
    %cst_44 = arith.constant dense<0.000000e+00> : vector<8xf32>
    %118 = vector.multi_reduction <add>, %117, %cst_44 [1] : vector<8x16xf32> to vector<8xf32>
    %119 = vector.shape_cast %118 : vector<8xf32> to vector<8x1xf32>
    %120 = tpu.reciprocal %119 {approx = true} : vector<8x1xf32> -> vector<8x1xf32>
    %121 = vector.broadcast %120 : vector<8x1xf32> to vector<8x16xf32>
    %122 = arith.mulf %117, %121 : vector<8x16xf32>
    %123 = arith.truncf %122 : vector<8x16xf32> to vector<8x16xbf16>
    %cst_45 = arith.constant dense<0.000000e+00> : vector<8x8xf32>
    %124 = tpu.matmul %123, %109, %cst_45 {dimension_numbers = #tpu.dot_dimension_numbers<[1], [0], [0], [1], [0, 0, 1, 1], [], []>} : vector<8x16xbf16>, vector<16x8xbf16>, vector<8x8xf32> -> vector<8x8xf32>
    %125 = arith.truncf %124 : vector<8x8xf32> to vector<8x8xbf16>
    %126 = vector.extract_strided_slice %39 {offsets = [24, 0], sizes = [8, 32], strides = [1, 1]} : vector<32x32xbf16> to vector<8x32xbf16>
    %cst_46 = arith.constant dense<0.000000e+00> : vector<8x32xf32>
    %127 = tpu.matmul %125, %126, %cst_46 {dimension_numbers = #tpu.dot_dimension_numbers<[1], [0], [0], [1], [0, 0, 1, 1], [], []>} : vector<8x8xbf16>, vector<8x32xbf16>, vector<8x32xf32> -> vector<8x32xf32>
    %128 = arith.addf %106, %127 : vector<8x32xf32>
    %c0_47 = arith.constant 0 : index
    %c0_48 = arith.constant 0 : index
    %129 = vector.load %arg13[%c0_47, %c0_48] : memref<1x32xf32, #tpu.memory_space<vmem>>, vector<1x32xf32>
    %130 = vector.broadcast %129 : vector<1x32xf32> to vector<8x32xf32>
    %131 = arith.addf %128, %130 : vector<8x32xf32>
    %132 = arith.addf %4, %131 : vector<8x32xf32>
    %c0_49 = arith.constant 0 : index
    %c0_50 = arith.constant 0 : index
    %133 = vector.load %arg6[%c0_49, %c0_50] : memref<1x32xf32, #tpu.memory_space<vmem>>, vector<1x32xf32>
    %c0_51 = arith.constant 0 : index
    %c0_52 = arith.constant 0 : index
    %134 = vector.load %arg7[%c0_51, %c0_52] : memref<1x32xf32, #tpu.memory_space<vmem>>, vector<1x32xf32>
    %cst_53 = arith.constant dense<0.000000e+00> : vector<8xf32>
    %135 = vector.multi_reduction <add>, %132, %cst_53 [1] : vector<8x32xf32> to vector<8xf32>
    %136 = vector.shape_cast %135 : vector<8xf32> to vector<8x1xf32>
    %cst_54 = arith.constant 3.200000e+01 : f32
    %137 = vector.broadcast %cst_54 : f32 to vector<8x1xf32>
    %138 = arith.divf %136, %137 : vector<8x1xf32>
    %139 = vector.broadcast %138 : vector<8x1xf32> to vector<8x32xf32>
    %140 = arith.subf %132, %139 : vector<8x32xf32>
    %141 = arith.mulf %140, %140 : vector<8x32xf32>
    %cst_55 = arith.constant dense<0.000000e+00> : vector<8xf32>
    %142 = vector.multi_reduction <add>, %141, %cst_55 [1] : vector<8x32xf32> to vector<8xf32>
    %143 = vector.shape_cast %142 : vector<8xf32> to vector<8x1xf32>
    %cst_56 = arith.constant 3.100000e+01 : f32
    %144 = vector.broadcast %cst_56 : f32 to vector<8x1xf32>
    %145 = arith.divf %143, %144 : vector<8x1xf32>
    %146 = math.sqrt %145 : vector<8x1xf32>
    %cst_57 = arith.constant 9.99999997E-7 : f32
    %147 = vector.broadcast %cst_57 : f32 to vector<8x1xf32>
    %148 = arith.addf %146, %147 : vector<8x1xf32>
    %149 = tpu.reciprocal %148 {approx = true} : vector<8x1xf32> -> vector<8x1xf32>
    %150 = vector.broadcast %138 : vector<8x1xf32> to vector<8x32xf32>
    %151 = arith.subf %132, %150 : vector<8x32xf32>
    %152 = vector.broadcast %149 : vector<8x1xf32> to vector<8x32xf32>
    %153 = arith.mulf %151, %152 : vector<8x32xf32>
    %154 = vector.broadcast %133 : vector<1x32xf32> to vector<8x32xf32>
    %155 = arith.mulf %154, %153 : vector<8x32xf32>
    %156 = vector.broadcast %134 : vector<1x32xf32> to vector<8x32xf32>
    %157 = arith.addf %155, %156 : vector<8x32xf32>
    %158 = arith.truncf %157 : vector<8x32xf32> to vector<8x32xbf16>
    %c0_58 = arith.constant 0 : index
    %c0_59 = arith.constant 0 : index
    %159 = vector.load %arg14[%c0_58, %c0_59] : memref<32x64xbf16, #tpu.memory_space<vmem>>, vector<32x64xbf16>
    %cst_60 = arith.constant dense<0.000000e+00> : vector<8x64xf32>
    %160 = tpu.matmul %158, %159, %cst_60 {dimension_numbers = #tpu.dot_dimension_numbers<[1], [0], [0], [1], [0, 0, 1, 1], [], []>} : vector<8x32xbf16>, vector<32x64xbf16>, vector<8x64xf32> -> vector<8x64xf32>
    %c0_61 = arith.constant 0 : index
    %c0_62 = arith.constant 0 : index
    %161 = vector.load %arg15[%c0_61, %c0_62] : memref<1x64xf32, #tpu.memory_space<vmem>>, vector<1x64xf32>
    %162 = vector.broadcast %161 : vector<1x64xf32> to vector<8x64xf32>
    %163 = arith.addf %160, %162 : vector<8x64xf32>
    %cst_63 = arith.constant 0.000000e+00 : f32
    %164 = vector.broadcast %cst_63 : f32 to vector<8x64xf32>
    %165 = arith.maximumf %163, %164 : vector<8x64xf32>
    %166 = arith.truncf %165 : vector<8x64xf32> to vector<8x64xbf16>
    %c0_64 = arith.constant 0 : index
    %c0_65 = arith.constant 0 : index
    %167 = vector.load %arg16[%c0_64, %c0_65] : memref<64x32xbf16, #tpu.memory_space<vmem>>, vector<64x32xbf16>
    %cst_66 = arith.constant dense<0.000000e+00> : vector<8x32xf32>
    %168 = tpu.matmul %166, %167, %cst_66 {dimension_numbers = #tpu.dot_dimension_numbers<[1], [0], [0], [1], [0, 0, 1, 1], [], []>} : vector<8x64xbf16>, vector<64x32xbf16>, vector<8x32xf32> -> vector<8x32xf32>
    %c0_67 = arith.constant 0 : index
    %c0_68 = arith.constant 0 : index
    %169 = vector.load %arg17[%c0_67, %c0_68] : memref<1x32xf32, #tpu.memory_space<vmem>>, vector<1x32xf32>
    %170 = vector.broadcast %169 : vector<1x32xf32> to vector<8x32xf32>
    %171 = arith.addf %168, %170 : vector<8x32xf32>
    %172 = arith.addf %171, %157 : vector<8x32xf32>
    %c0_69 = arith.constant 0 : index
    %c0_70 = arith.constant 0 : index
    %c0_71 = arith.constant 0 : index
    %173 = vector.load %arg18[%c0_69, %c0_70, %c0_71] : memref<1x8x32xf32, #tpu.memory_space<vmem>>, vector<1x8x32xf32>
    %174 = vector.shape_cast %173 : vector<1x8x32xf32> to vector<8x32xf32>
    %175 = vector.shape_cast %172 : vector<8x32xf32> to vector<1x8x32xf32>
    tpu.vector_store %arg18[%c0_69, %c0_70, %c0_71], %175 {strides = array<i32>} : memref<1x8x32xf32, #tpu.memory_space<vmem>>, vector<1x8x32xf32>,
    return
  }
  func.func @transform_0(%arg0: i32, %arg1: i32) -> (i32, i32, i32) {
    %c0_i32 = arith.constant 0 : i32
    %c0_i32_0 = arith.constant 0 : i32
    return %arg0, %arg1, %c0_i32 : i32, i32, i32
  }
  func.func @transform_1(%arg0: i32, %arg1: i32) -> (i32, i32, i32) {
    %c0_i32 = arith.constant 0 : i32
    %c0_i32_0 = arith.constant 0 : i32
    %c0_i32_1 = arith.constant 0 : i32
    return %arg0, %c0_i32, %c0_i32_0 : i32, i32, i32
  }
  func.func @transform_2(%arg0: i32, %arg1: i32) -> (i32, i32) {
    %c0_i32 = arith.constant 0 : i32
    %c0_i32_0 = arith.constant 0 : i32
    %c0_i32_1 = arith.constant 0 : i32
    return %c0_i32, %c0_i32_0 : i32, i32
  }
  func.func @transform_3(%arg0: i32, %arg1: i32) -> (i32, i32) {
    %c0_i32 = arith.constant 0 : i32
    %c0_i32_0 = arith.constant 0 : i32
    %c0_i32_1 = arith.constant 0 : i32
    return %c0_i32, %c0_i32_0 : i32, i32
  }
  func.func @transform_4(%arg0: i32, %arg1: i32) -> (i32, i32) {
    %c0_i32 = arith.constant 0 : i32
    %c0_i32_0 = arith.constant 0 : i32
    %c0_i32_1 = arith.constant 0 : i32
    return %c0_i32, %c0_i32_0 : i32, i32
  }
  func.func @transform_5(%arg0: i32, %arg1: i32) -> (i32, i32) {
    %c0_i32 = arith.constant 0 : i32
    %c0_i32_0 = arith.constant 0 : i32
    %c0_i32_1 = arith.constant 0 : i32
    return %c0_i32, %c0_i32_0 : i32, i32
  }
  func.func @transform_6(%arg0: i32, %arg1: i32) -> (i32, i32) {
    %c0_i32 = arith.constant 0 : i32
    %c0_i32_0 = arith.constant 0 : i32
    %c0_i32_1 = arith.constant 0 : i32
    return %c0_i32, %c0_i32_0 : i32, i32
  }
  func.func @transform_7(%arg0: i32, %arg1: i32) -> (i32, i32) {
    %c0_i32 = arith.constant 0 : i32
    %c0_i32_0 = arith.constant 0 : i32
    %c0_i32_1 = arith.constant 0 : i32
    return %c0_i32, %c0_i32_0 : i32, i32
  }
  func.func @transform_8(%arg0: i32, %arg1: i32) -> (i32, i32) {
    %c0_i32 = arith.constant 0 : i32
    %c0_i32_0 = arith.constant 0 : i32
    %c0_i32_1 = arith.constant 0 : i32
    return %c0_i32, %c0_i32_0 : i32, i32
  }
  func.func @transform_9(%arg0: i32, %arg1: i32) -> (i32, i32) {
    %c0_i32 = arith.constant 0 : i32
    %c0_i32_0 = arith.constant 0 : i32
    %c0_i32_1 = arith.constant 0 : i32
    return %c0_i32, %c0_i32_0 : i32, i32
  }
  func.func @transform_10(%arg0: i32, %arg1: i32) -> (i32, i32) {
    %c0_i32 = arith.constant 0 : i32
    %c0_i32_0 = arith.constant 0 : i32
    %c0_i32_1 = arith.constant 0 : i32
    return %c0_i32, %c0_i32_0 : i32, i32
  }
  func.func @transform_11(%arg0: i32, %arg1: i32) -> (i32, i32) {
    %c0_i32 = arith.constant 0 : i32
    %c0_i32_0 = arith.constant 0 : i32
    %c0_i32_1 = arith.constant 0 : i32
    return %c0_i32, %c0_i32_0 : i32, i32
  }
  func.func @transform_12(%arg0: i32, %arg1: i32) -> (i32, i32) {
    %c0_i32 = arith.constant 0 : i32
    %c0_i32_0 = arith.constant 0 : i32
    %c0_i32_1 = arith.constant 0 : i32
    return %c0_i32, %c0_i32_0 : i32, i32
  }
  func.func @transform_13(%arg0: i32, %arg1: i32) -> (i32, i32) {
    %c0_i32 = arith.constant 0 : i32
    %c0_i32_0 = arith.constant 0 : i32
    %c0_i32_1 = arith.constant 0 : i32
    return %c0_i32, %c0_i32_0 : i32, i32
  }
  func.func @transform_14(%arg0: i32, %arg1: i32) -> (i32, i32) {
    %c0_i32 = arith.constant 0 : i32
    %c0_i32_0 = arith.constant 0 : i32
    %c0_i32_1 = arith.constant 0 : i32
    return %c0_i32, %c0_i32_0 : i32, i32
  }
  func.func @transform_15(%arg0: i32, %arg1: i32) -> (i32, i32) {
    %c0_i32 = arith.constant 0 : i32
    %c0_i32_0 = arith.constant 0 : i32
    %c0_i32_1 = arith.constant 0 : i32
    return %c0_i32, %c0_i32_0 : i32, i32
  }
  func.func @transform_16(%arg0: i32, %arg1: i32) -> (i32, i32, i32) {
    %c0_i32 = arith.constant 0 : i32
    %c0_i32_0 = arith.constant 0 : i32
    return %arg0, %arg1, %c0_i32 : i32, i32, i32
  }
}

</mosaic_0001>

<llo_original>
// kernel: tpu_custom_call.1
$region0: #{tpu_custom_call.1}
  #allocation0 [shape = 'u32[]', space=smem, size = 0x4, offset = 0x4, fixed_abs, tag = 'smem constant byte address 0x4 - core index']
  #allocation1 [shape = 'u32[144,128]{1,0:T(1,128)}', space=vmem, size = 0x12000, scoped, tag = 'internal scratch']
  #allocation2 [shape = 'bf16[16,32]{1,0:T(16,128)(2,1)}', space=vmem, size = 0x1000, scoped, tag = 'scratch operand']
  #allocation3 [shape = 'bf16[16,32]{1,0:T(16,128)(2,1)}', space=vmem, size = 0x1000, scoped, tag = 'scratch operand']
  %s0 = inlined_call_operand.vmem [shape: f32[2,16,32], index: 0, kind: input, shape index: {}]
  %s1 = inlined_call_operand.hbm [shape: f32[2,16,32], index: 1, kind: input, shape index: {}]
  %s2 = inlined_call_operand.vmem [shape: f32[1,32], index: 2, kind: input, shape index: {}]
  %s3 = inlined_call_operand.vmem [shape: f32[1,32], index: 3, kind: input, shape index: {}]
  %s4 = inlined_call_operand.hbm [shape: f32[1,32], index: 4, kind: input, shape index: {}]
  %s5 = inlined_call_operand.hbm [shape: f32[1,32], index: 5, kind: input, shape index: {}]
  %s6 = inlined_call_operand.vmem [shape: bf16[32,32], index: 6, kind: input, shape index: {}]
  %s7 = inlined_call_operand.hbm [shape: f32[1,32], index: 7, kind: input, shape index: {}]
  %s8 = inlined_call_operand.hbm [shape: bf16[32,64], index: 8, kind: input, shape index: {}]
  %s9 = inlined_call_operand.hbm [shape: f32[1,64], index: 9, kind: input, shape index: {}]
  %s10 = inlined_call_operand.vmem [shape: bf16[32,32], index: 10, kind: input, shape index: {}]
  %s11 = inlined_call_operand.vmem [shape: f32[1,32], index: 11, kind: input, shape index: {}]
  %s12 = inlined_call_operand.hbm [shape: bf16[32,64], index: 12, kind: input, shape index: {}]
  %s13 = inlined_call_operand.vmem [shape: f32[1,64], index: 13, kind: input, shape index: {}]
  %s14 = inlined_call_operand.vmem [shape: bf16[64,32], index: 14, kind: input, shape index: {}]
  %s15 = inlined_call_operand.vmem [shape: f32[1,32], index: 15, kind: input, shape index: {}]
  %s16 = inlined_call_operand.hbm [shape: f32[2,16,32], index: 16, kind: output, shape index: {}]
  %s17 = sld [smem:[#allocation0]]
  $region129: #{tpu_custom_call.1} parent=0
    _
  %s19 = ssub.s32 1, %s17
  %s20 = scalar_select 0, %s19, %s17
  $region1: #{tpu_custom_call.1} parent=0
    #allocation4 [shape = 'u8[16384]{0}', space=vmem, size = 0x4000, scoped, tag = 'input window, operand 1']
    #allocation5 [shape = 's32[2]{0}', space=sflag, size = 0x8, scoped, tag = 'scoped memory for tpu_custom_call.1']
    #allocation6 [shape = 's32[2]{0}', space=sflag, size = 0x8, scoped, tag = 'scoped memory for tpu_custom_call.1']
    #allocation7 [shape = 'u8[512]{0}', space=vmem, size = 0x400, scoped, tag = 'input window, operand 4, single buffered']
    #allocation8 [shape = 's32[1]{0}', space=sflag, size = 0x4, scoped, tag = 'scoped memory for tpu_custom_call.1']
    #allocation9 [shape = 'u8[512]{0}', space=vmem, size = 0x400, scoped, tag = 'input window, operand 5, single buffered']
    #allocation10 [shape = 'u8[512]{0}', space=vmem, size = 0x400, scoped, tag = 'input window, operand 7, single buffered']
    #allocation11 [shape = 's32[1]{0}', space=sflag, size = 0x4, scoped, tag = 'scoped memory for tpu_custom_call.1']
    #allocation12 [shape = 'u8[8192]{0}', space=vmem, size = 0x2000, scoped, tag = 'input window, operand 8, single buffered']
    #allocation13 [shape = 'u8[512]{0}', space=vmem, size = 0x400, scoped, tag = 'input window, operand 9, single buffered']
    #allocation14 [shape = 's32[1]{0}', space=sflag, size = 0x4, scoped, tag = 'scoped memory for tpu_custom_call.1']
    #allocation15 [shape = 'u8[8192]{0}', space=vmem, size = 0x2000, scoped, tag = 'input window, operand 12, single buffered']
    #allocation16 [shape = 'u8[8192]{0}', space=vmem, size = 0x2000, scoped, tag = 'output window, operand 0']
    %21 = vsyncpa [#allocation5], 0
    %s22 = scalar_lea.sflag [#allocation5], 1
    %23 = vsyncpa %s22, 0
    %24 = vsyncpa [#allocation8], 0
    %25 = vsyncpa [#allocation11], 0
    %26 = vsyncpa [#allocation14], 0
    %27 = vsyncpa [#allocation6], 0
    %s28 = scalar_lea.sflag [#allocation6], 1
    %29 = vsyncpa %s28, 0
    loop: start=0, step=1, limit=6
    $region2: #{tpu_custom_call.1} parent=1 // loop_pre_header
      _
    $region3: #{tpu_custom_call.1} parent=1 // loop_header
      %s31 = sphi 0, %s35
      %p32 = scmp.ge.s32.totalorder %s31, 6
      %s38 = sphi 0, %s50
      %s39 = sphi 0, %s46
      %s40 = sphi 0, %s38
      %s41 = sphi 0, %s39
      %s42 = sphi 0, %s40
      %s43 = sphi 0, %s41
      %s55 = sphi 0, %s57
      %s58 = sphi 0, %s55
      %s59 = sphi 0, %s58
      %s75 = sphi 0, %s59
      %s81 = sphi 0, %s83
      %s84 = sphi 0, %s81
      %s85 = sphi 0, %s84
      %s101 = sphi 0, %s85
      %s105 = sphi 0, %s105
      %s107 = sphi 0, %s105
      %s108 = sphi 0, %s107
      %s122 = sphi 0, %s108
      %s126 = sphi 0, %s126
      %s128 = sphi 0, %s126
      %s129 = sphi 0, %s128
      %s143 = sphi 0, %s129
      %s147 = sphi 0, %s147
      %s149 = sphi 0, %s147
      %s150 = sphi 0, %s149
      %s164 = sphi 0, %s150
      %s168 = sphi 0, %s168
      %s170 = sphi 0, %s168
      %s171 = sphi 0, %s170
      %s185 = sphi 0, %s171
      %s189 = sphi 0, %s189
      %s191 = sphi 0, %s189
      %s192 = sphi 0, %s191
      %s206 = sphi 0, %s192
      %s210 = sphi 0, %s210
      %s212 = sphi 0, %s210
      %s213 = sphi 0, %s212
      %s227 = sphi 0, %s213
      %s231 = sphi 0, %s231
      %s233 = sphi 0, %s231
      %s234 = sphi 0, %s233
      %s248 = sphi 0, %s234
      %s252 = sphi 0, %s252
      %s254 = sphi 0, %s252
      %s255 = sphi 0, %s254
      %s269 = sphi 0, %s255
      %s273 = sphi 0, %s273
      %s275 = sphi 0, %s273
      %s276 = sphi 0, %s275
      %s290 = sphi 0, %s276
      %s294 = sphi 0, %s294
      %s296 = sphi 0, %s294
      %s297 = sphi 0, %s296
      %s311 = sphi 0, %s297
      %s315 = sphi 0, %s315
      %s317 = sphi 0, %s315
      %s318 = sphi 0, %s317
      %s332 = sphi 0, %s318
      %s336 = sphi 0, %s336
      %s338 = sphi 0, %s336
      %s339 = sphi 0, %s338
      %s353 = sphi 0, %s339
      %s357 = sphi 0, %s357
      %s359 = sphi 0, %s357
      %s360 = sphi 0, %s359
      %s374 = sphi 0, %s360
      %s378 = sphi 0, %s378
      %s380 = sphi 0, %s378
      %s381 = sphi 0, %s380
      %s395 = sphi 0, %s381
      %s403 = sphi 0, %s405
      %s406 = sphi 0, %s403
      %s407 = sphi 0, %s406
      %s423 = sphi 0, %s407
    $region4: #{tpu_custom_call.1} parent=1 // loop_header_branch
      %34 = sbr.rel (%p32) target = $region8
    $region5: #{tpu_custom_call.1} parent=1 // loop_body
      %s36 = ssub.s32 %s31, 1
      %s37 = ssub.s32 %s31, 2
      %s44 = sadd.s32 1, %s39
      %p45 = scmp.ge.s32.totalorder %s44, 2
      %s46 = scalar_select %p45, 0, %s44
      %s47 = sadd.s32 1, %s38
      %s48 = scalar_select %p45, %s47, %s38
      %p49 = scmp.ge.s32.totalorder %s48, 2
      %s50 = scalar_select %p49, 0, %s48
      %s51 = ssub.s32 %s38, %s50
      %s52 = ssub.s32 %s39, %s46
      %s53 = sor.u32 %s51, %s52
      %p54 = scmp.eq.s32.totalorder %s53, 0
      %s56 = sadd.s32 %s55, 1
      %s57 = scalar_select %p54, %s55, %s56
      %p60 = pneg %p54
      %p61 = scmp.eq.s32.totalorder %s31, 3
      %p62 = por %p60, %p61
      %p63 = scmp.ne.s32.totalorder %s55, %s58
      %p64 = scmp.eq.s32.totalorder %s31, 0
      %p65 = por %p63, %p64
      %p66 = scmp.ne.s32.totalorder %s55, %s58
      %p67 = scmp.eq.s32.totalorder %s36, 3
      %p68 = por %p66, %p67
      %p69 = scmp.ne.s32.totalorder %s58, %s59
      %p70 = scmp.eq.s32.totalorder %s36, 0
      %p71 = por %p69, %p70
      %p72 = scmp.ne.s32.totalorder %s58, %s59
      %p73 = scmp.eq.s32.totalorder %s37, 3
      %p74 = por %p72, %p73
      %p76 = scmp.ne.s32.totalorder %s59, %s75
      %p77 = scmp.eq.s32.totalorder %s37, 0
      %p78 = por %p76, %p77
      %s79 = ssub.s32 %s38, %s50
      %p80 = scmp.eq.s32.totalorder %s79, 0
      %s82 = sadd.s32 %s81, 1
      %s83 = scalar_select %p80, %s81, %s82
      %p86 = pneg %p80
      %p87 = scmp.eq.s32.totalorder %s31, 3
      %p88 = por %p86, %p87
      %p89 = scmp.ne.s32.totalorder %s81, %s84
      %p90 = scmp.eq.s32.totalorder %s31, 0
      %p91 = por %p89, %p90
      %p92 = scmp.ne.s32.totalorder %s81, %s84
      %p93 = scmp.eq.s32.totalorder %s36, 3
      %p94 = por %p92, %p93
      %p95 = scmp.ne.s32.totalorder %s84, %s85
      %p96 = scmp.eq.s32.totalorder %s36, 0
      %p97 = por %p95, %p96
      %p98 = scmp.ne.s32.totalorder %s84, %s85
      %p99 = scmp.eq.s32.totalorder %s37, 3
      %p100 = por %p98, %p99
      %p102 = scmp.ne.s32.totalorder %s85, %s101
      %p103 = scmp.eq.s32.totalorder %s37, 0
      %p104 = por %p102, %p103
      %s106 = sadd.s32 %s105, 1
      %p109 = scmp.eq.s32.totalorder %s31, 3
      %p110 = scmp.ne.s32.totalorder %s105, %s107
      %p111 = scmp.eq.s32.totalorder %s31, 0
      %p112 = por %p110, %p111
      %p113 = scmp.ne.s32.totalorder %s105, %s107
      %p114 = scmp.eq.s32.totalorder %s36, 3
      %p115 = por %p113, %p114
      %p116 = scmp.ne.s32.totalorder %s107, %s108
      %p117 = scmp.eq.s32.totalorder %s36, 0
      %p118 = por %p116, %p117
      %p119 = scmp.ne.s32.totalorder %s107, %s108
      %p120 = scmp.eq.s32.totalorder %s37, 3
      %p121 = por %p119, %p120
      %p123 = scmp.ne.s32.totalorder %s108, %s122
      %p124 = scmp.eq.s32.totalorder %s37, 0
      %p125 = por %p123, %p124
      %s127 = sadd.s32 %s126, 1
      %p130 = scmp.eq.s32.totalorder %s31, 3
      %p131 = scmp.ne.s32.totalorder %s126, %s128
      %p132 = scmp.eq.s32.totalorder %s31, 0
      %p133 = por %p131, %p132
      %p134 = scmp.ne.s32.totalorder %s126, %s128
      %p135 = scmp.eq.s32.totalorder %s36, 3
      %p136 = por %p134, %p135
      %p137 = scmp.ne.s32.totalorder %s128, %s129
      %p138 = scmp.eq.s32.totalorder %s36, 0
      %p139 = por %p137, %p138
      %p140 = scmp.ne.s32.totalorder %s128, %s129
      %p141 = scmp.eq.s32.totalorder %s37, 3
      %p142 = por %p140, %p141
      %p144 = scmp.ne.s32.totalorder %s129, %s143
      %p145 = scmp.eq.s32.totalorder %s37, 0
      %p146 = por %p144, %p145
      %s148 = sadd.s32 %s147, 1
      %p151 = scmp.eq.s32.totalorder %s31, 3
      %p152 = scmp.ne.s32.totalorder %s147, %s149
      %p153 = scmp.eq.s32.totalorder %s31, 0
      %p154 = por %p152, %p153
      %p155 = scmp.ne.s32.totalorder %s147, %s149
      %p156 = scmp.eq.s32.totalorder %s36, 3
      %p157 = por %p155, %p156
      %p158 = scmp.ne.s32.totalorder %s149, %s150
      %p159 = scmp.eq.s32.totalorder %s36, 0
      %p160 = por %p158, %p159
      %p161 = scmp.ne.s32.totalorder %s149, %s150
      %p162 = scmp.eq.s32.totalorder %s37, 3
      %p163 = por %p161, %p162
      %p165 = scmp.ne.s32.totalorder %s150, %s164
      %p166 = scmp.eq.s32.totalorder %s37, 0
      %p167 = por %p165, %p166
      %s169 = sadd.s32 %s168, 1
      %p172 = scmp.eq.s32.totalorder %s31, 3
      %p173 = scmp.ne.s32.totalorder %s168, %s170
      %p174 = scmp.eq.s32.totalorder %s31, 0
      %p175 = por %p173, %p174
      %p176 = scmp.ne.s32.totalorder %s168, %s170
      %p177 = scmp.eq.s32.totalorder %s36, 3
      %p178 = por %p176, %p177
      %p179 = scmp.ne.s32.totalorder %s170, %s171
      %p180 = scmp.eq.s32.totalorder %s36, 0
      %p181 = por %p179, %p180
      %p182 = scmp.ne.s32.totalorder %s170, %s171
      %p183 = scmp.eq.s32.totalorder %s37, 3
      %p184 = por %p182, %p183
      %p186 = scmp.ne.s32.totalorder %s171, %s185
      %p187 = scmp.eq.s32.totalorder %s37, 0
      %p188 = por %p186, %p187
      %s190 = sadd.s32 %s189, 1
      %p193 = scmp.eq.s32.totalorder %s31, 3
      %p194 = scmp.ne.s32.totalorder %s189, %s191
      %p195 = scmp.eq.s32.totalorder %s31, 0
      %p196 = por %p194, %p195
      %p197 = scmp.ne.s32.totalorder %s189, %s191
      %p198 = scmp.eq.s32.totalorder %s36, 3
      %p199 = por %p197, %p198
      %p200 = scmp.ne.s32.totalorder %s191, %s192
      %p201 = scmp.eq.s32.totalorder %s36, 0
      %p202 = por %p200, %p201
      %p203 = scmp.ne.s32.totalorder %s191, %s192
      %p204 = scmp.eq.s32.totalorder %s37, 3
      %p205 = por %p203, %p204
      %p207 = scmp.ne.s32.totalorder %s192, %s206
      %p208 = scmp.eq.s32.totalorder %s37, 0
      %p209 = por %p207, %p208
      %s211 = sadd.s32 %s210, 1
      %p214 = scmp.eq.s32.totalorder %s31, 3
      %p215 = scmp.ne.s32.totalorder %s210, %s212
      %p216 = scmp.eq.s32.totalorder %s31, 0
      %p217 = por %p215, %p216
      %p218 = scmp.ne.s32.totalorder %s210, %s212
      %p219 = scmp.eq.s32.totalorder %s36, 3
      %p220 = por %p218, %p219
      %p221 = scmp.ne.s32.totalorder %s212, %s213
      %p222 = scmp.eq.s32.totalorder %s36, 0
      %p223 = por %p221, %p222
      %p224 = scmp.ne.s32.totalorder %s212, %s213
      %p225 = scmp.eq.s32.totalorder %s37, 3
      %p226 = por %p224, %p225
      %p228 = scmp.ne.s32.totalorder %s213, %s227
      %p229 = scmp.eq.s32.totalorder %s37, 0
      %p230 = por %p228, %p229
      %s232 = sadd.s32 %s231, 1
      %p235 = scmp.eq.s32.totalorder %s31, 3
      %p236 = scmp.ne.s32.totalorder %s231, %s233
      %p237 = scmp.eq.s32.totalorder %s31, 0
      %p238 = por %p236, %p237
      %p239 = scmp.ne.s32.totalorder %s231, %s233
      %p240 = scmp.eq.s32.totalorder %s36, 3
      %p241 = por %p239, %p240
      %p242 = scmp.ne.s32.totalorder %s233, %s234
      %p243 = scmp.eq.s32.totalorder %s36, 0
      %p244 = por %p242, %p243
      %p245 = scmp.ne.s32.totalorder %s233, %s234
      %p246 = scmp.eq.s32.totalorder %s37, 3
      %p247 = por %p245, %p246
      %p249 = scmp.ne.s32.totalorder %s234, %s248
      %p250 = scmp.eq.s32.totalorder %s37, 0
      %p251 = por %p249, %p250
      %s253 = sadd.s32 %s252, 1
      %p256 = scmp.eq.s32.totalorder %s31, 3
      %p257 = scmp.ne.s32.totalorder %s252, %s254
      %p258 = scmp.eq.s32.totalorder %s31, 0
      %p259 = por %p257, %p258
      %p260 = scmp.ne.s32.totalorder %s252, %s254
      %p261 = scmp.eq.s32.totalorder %s36, 3
      %p262 = por %p260, %p261
      %p263 = scmp.ne.s32.totalorder %s254, %s255
      %p264 = scmp.eq.s32.totalorder %s36, 0
      %p265 = por %p263, %p264
      %p266 = scmp.ne.s32.totalorder %s254, %s255
      %p267 = scmp.eq.s32.totalorder %s37, 3
      %p268 = por %p266, %p267
      %p270 = scmp.ne.s32.totalorder %s255, %s269
      %p271 = scmp.eq.s32.totalorder %s37, 0
      %p272 = por %p270, %p271
      %s274 = sadd.s32 %s273, 1
      %p277 = scmp.eq.s32.totalorder %s31, 3
      %p278 = scmp.ne.s32.totalorder %s273, %s275
      %p279 = scmp.eq.s32.totalorder %s31, 0
      %p280 = por %p278, %p279
      %p281 = scmp.ne.s32.totalorder %s273, %s275
      %p282 = scmp.eq.s32.totalorder %s36, 3
      %p283 = por %p281, %p282
      %p284 = scmp.ne.s32.totalorder %s275, %s276
      %p285 = scmp.eq.s32.totalorder %s36, 0
      %p286 = por %p284, %p285
      %p287 = scmp.ne.s32.totalorder %s275, %s276
      %p288 = scmp.eq.s32.totalorder %s37, 3
      %p289 = por %p287, %p288
      %p291 = scmp.ne.s32.totalorder %s276, %s290
      %p292 = scmp.eq.s32.totalorder %s37, 0
      %p293 = por %p291, %p292
      %s295 = sadd.s32 %s294, 1
      %p298 = scmp.eq.s32.totalorder %s31, 3
      %p299 = scmp.ne.s32.totalorder %s294, %s296
      %p300 = scmp.eq.s32.totalorder %s31, 0
      %p301 = por %p299, %p300
      %p302 = scmp.ne.s32.totalorder %s294, %s296
      %p303 = scmp.eq.s32.totalorder %s36, 3
      %p304 = por %p302, %p303
      %p305 = scmp.ne.s32.totalorder %s296, %s297
      %p306 = scmp.eq.s32.totalorder %s36, 0
      %p307 = por %p305, %p306
      %p308 = scmp.ne.s32.totalorder %s296, %s297
      %p309 = scmp.eq.s32.totalorder %s37, 3
      %p310 = por %p308, %p309
      %p312 = scmp.ne.s32.totalorder %s297, %s311
      %p313 = scmp.eq.s32.totalorder %s37, 0
      %p314 = por %p312, %p313
      %s316 = sadd.s32 %s315, 1
      %p319 = scmp.eq.s32.totalorder %s31, 3
      %p320 = scmp.ne.s32.totalorder %s315, %s317
      %p321 = scmp.eq.s32.totalorder %s31, 0
      %p322 = por %p320, %p321
      %p323 = scmp.ne.s32.totalorder %s315, %s317
      %p324 = scmp.eq.s32.totalorder %s36, 3
      %p325 = por %p323, %p324
      %p326 = scmp.ne.s32.totalorder %s317, %s318
      %p327 = scmp.eq.s32.totalorder %s36, 0
      %p328 = por %p326, %p327
      %p329 = scmp.ne.s32.totalorder %s317, %s318
      %p330 = scmp.eq.s32.totalorder %s37, 3
      %p331 = por %p329, %p330
      %p333 = scmp.ne.s32.totalorder %s318, %s332
      %p334 = scmp.eq.s32.totalorder %s37, 0
      %p335 = por %p333, %p334
      %s337 = sadd.s32 %s336, 1
      %p340 = scmp.eq.s32.totalorder %s31, 3
      %p341 = scmp.ne.s32.totalorder %s336, %s338
      %p342 = scmp.eq.s32.totalorder %s31, 0
      %p343 = por %p341, %p342
      %p344 = scmp.ne.s32.totalorder %s336, %s338
      %p345 = scmp.eq.s32.totalorder %s36, 3
      %p346 = por %p344, %p345
      %p347 = scmp.ne.s32.totalorder %s338, %s339
      %p348 = scmp.eq.s32.totalorder %s36, 0
      %p349 = por %p347, %p348
      %p350 = scmp.ne.s32.totalorder %s338, %s339
      %p351 = scmp.eq.s32.totalorder %s37, 3
      %p352 = por %p350, %p351
      %p354 = scmp.ne.s32.totalorder %s339, %s353
      %p355 = scmp.eq.s32.totalorder %s37, 0
      %p356 = por %p354, %p355
      %s358 = sadd.s32 %s357, 1
      %p361 = scmp.eq.s32.totalorder %s31, 3
      %p362 = scmp.ne.s32.totalorder %s357, %s359
      %p363 = scmp.eq.s32.totalorder %s31, 0
      %p364 = por %p362, %p363
      %p365 = scmp.ne.s32.totalorder %s357, %s359
      %p366 = scmp.eq.s32.totalorder %s36, 3
      %p367 = por %p365, %p366
      %p368 = scmp.ne.s32.totalorder %s359, %s360
      %p369 = scmp.eq.s32.totalorder %s36, 0
      %p370 = por %p368, %p369
      %p371 = scmp.ne.s32.totalorder %s359, %s360
      %p372 = scmp.eq.s32.totalorder %s37, 3
      %p373 = por %p371, %p372
      %p375 = scmp.ne.s32.totalorder %s360, %s374
      %p376 = scmp.eq.s32.totalorder %s37, 0
      %p377 = por %p375, %p376
      %s379 = sadd.s32 %s378, 1
      %p382 = scmp.eq.s32.totalorder %s31, 3
      %p383 = scmp.ne.s32.totalorder %s378, %s380
      %p384 = scmp.eq.s32.totalorder %s31, 0
      %p385 = por %p383, %p384
      %p386 = scmp.ne.s32.totalorder %s378, %s380
      %p387 = scmp.eq.s32.totalorder %s36, 3
      %p388 = por %p386, %p387
      %p389 = scmp.ne.s32.totalorder %s380, %s381
      %p390 = scmp.eq.s32.totalorder %s36, 0
      %p391 = por %p389, %p390
      %p392 = scmp.ne.s32.totalorder %s380, %s381
      %p393 = scmp.eq.s32.totalorder %s37, 3
      %p394 = por %p392, %p393
      %p396 = scmp.ne.s32.totalorder %s381, %s395
      %p397 = scmp.eq.s32.totalorder %s37, 0
      %p398 = por %p396, %p397
      %s399 = ssub.s32 %s38, %s50
      %s400 = ssub.s32 %s39, %s46
      %s401 = sor.u32 %s399, %s400
      %p402 = scmp.eq.s32.totalorder %s401, 0
      %s404 = sadd.s32 %s403, 1
      %s405 = scalar_select %p402, %s403, %s404
      %p408 = pneg %p402
      %p409 = scmp.eq.s32.totalorder %s31, 3
      %p410 = por %p408, %p409
      %p411 = scmp.ne.s32.totalorder %s403, %s406
      %p412 = scmp.eq.s32.totalorder %s31, 0
      %p413 = por %p411, %p412
      %p414 = scmp.ne.s32.totalorder %s403, %s406
      %p415 = scmp.eq.s32.totalorder %s36, 3
      %p416 = por %p414, %p415
      %p417 = scmp.ne.s32.totalorder %s406, %s407
      %p418 = scmp.eq.s32.totalorder %s36, 0
      %p419 = por %p417, %p418
      %p420 = scmp.ne.s32.totalorder %s406, %s407
      %p421 = scmp.eq.s32.totalorder %s37, 3
      %p422 = por %p420, %p421
      %p424 = scmp.ne.s32.totalorder %s407, %s423
      %p425 = scmp.eq.s32.totalorder %s37, 0
      %p426 = por %p424, %p425
      %p427 = scmp.le.s32.totalorder 1, %s31
      %p428 = scmp.lt.s32.totalorder %s31, 5
      %p429 = pnand %p427, %p428
      %p430 = pneg %p429
      // Predicated region
      $region9: #{tpu_custom_call.1} parent=5 // pred_check
        _
      $region10: #{tpu_custom_call.1} parent=5 // pred_check_branch
        %432 = sbr.rel (%p429) target = $region12
      $region11: #{tpu_custom_call.1} parent=5 // pred_region
        %s433 = ssub.s32 %s31, 1
        // Predicated region
        $region13: #{tpu_custom_call.1} parent=11 // pred_check
          %p434 = pneg %p118
        $region14: #{tpu_custom_call.1} parent=11 // pred_check_branch
          %436 = sbr.rel (%p434) target = $region16
        $region15: #{tpu_custom_call.1} parent=11 // pred_region
          _
        $region16: #{tpu_custom_call.1} parent=11 // pred_fallthru
          _
        // Predicated region
        $region17: #{tpu_custom_call.1} parent=11 // pred_check
          %p437 = pneg %p139
        $region18: #{tpu_custom_call.1} parent=11 // pred_check_branch
          %439 = sbr.rel (%p437) target = $region20
        $region19: #{tpu_custom_call.1} parent=11 // pred_region
          _
        $region20: #{tpu_custom_call.1} parent=11 // pred_fallthru
          _
        // Predicated region
        $region21: #{tpu_custom_call.1} parent=11 // pred_check
          %p440 = pneg %p160
        $region22: #{tpu_custom_call.1} parent=11 // pred_check_branch
          %442 = sbr.rel (%p440) target = $region24
        $region23: #{tpu_custom_call.1} parent=11 // pred_region
          %s444 = ssub.s32 16, 16
          %445 = vsyncadd [#allocation8], %s444
          %s447 = sshll.u32 [#allocation7], 4
          %s448 = int_to_ptr.vmem [resolvable:$true] %s447
          %450 = dma.hbm_to_vmem [thread:$0]  %s4, 16, %s448, [#allocation8]
        $region24: #{tpu_custom_call.1} parent=11 // pred_fallthru
          _
        // Predicated region
        $region25: #{tpu_custom_call.1} parent=11 // pred_check
          %p451 = pneg %p181
        $region26: #{tpu_custom_call.1} parent=11 // pred_check_branch
          %453 = sbr.rel (%p451) target = $region28
        $region27: #{tpu_custom_call.1} parent=11 // pred_region
          %s455 = ssub.s32 16, 16
          %456 = vsyncadd [#allocation8], %s455
          %s458 = sshll.u32 [#allocation9], 4
          %s459 = int_to_ptr.vmem [resolvable:$true] %s458
          %461 = dma.hbm_to_vmem [thread:$0]  %s5, 16, %s459, [#allocation8]
        $region28: #{tpu_custom_call.1} parent=11 // pred_fallthru
          _
        // Predicated region
        $region29: #{tpu_custom_call.1} parent=11 // pred_check
          %p462 = pneg %p202
        $region30: #{tpu_custom_call.1} parent=11 // pred_check_branch
          %464 = sbr.rel (%p462) target = $region32
        $region31: #{tpu_custom_call.1} parent=11 // pred_region
          _
        $region32: #{tpu_custom_call.1} parent=11 // pred_fallthru
          _
        // Predicated region
        $region33: #{tpu_custom_call.1} parent=11 // pred_check
          %p465 = pneg %p223
        $region34: #{tpu_custom_call.1} parent=11 // pred_check_branch
          %467 = sbr.rel (%p465) target = $region36
        $region35: #{tpu_custom_call.1} parent=11 // pred_region
          %s469 = ssub.s32 16, 16
          %470 = vsyncadd [#allocation11], %s469
          %s472 = sshll.u32 [#allocation10], 4
          %s473 = int_to_ptr.vmem [resolvable:$true] %s472
          %475 = dma.hbm_to_vmem [thread:$0]  %s7, 16, %s473, [#allocation11]
        $region36: #{tpu_custom_call.1} parent=11 // pred_fallthru
          _
        // Predicated region
        $region37: #{tpu_custom_call.1} parent=11 // pred_check
          %p476 = pneg %p244
        $region38: #{tpu_custom_call.1} parent=11 // pred_check_branch
          %478 = sbr.rel (%p476) target = $region40
        $region39: #{tpu_custom_call.1} parent=11 // pred_region
          %s480 = ssub.s32 256, 256
          %481 = vsyncadd [#allocation11], %s480
          %s482 = sshll.u32 [#allocation12], 4
          %s483 = int_to_ptr.vmem [resolvable:$true] %s482
          %488 = dma.hbm_to_vmem [thread:$0]  %s8, 256, %s483, [#allocation11], 64, 64, 4
        $region40: #{tpu_custom_call.1} parent=11 // pred_fallthru
          _
        // Predicated region
        $region41: #{tpu_custom_call.1} parent=11 // pred_check
          %p489 = pneg %p265
        $region42: #{tpu_custom_call.1} parent=11 // pred_check_branch
          %491 = sbr.rel (%p489) target = $region44
        $region43: #{tpu_custom_call.1} parent=11 // pred_region
          %s493 = ssub.s32 16, 16
          %494 = vsyncadd [#allocation14], %s493
          %s496 = sshll.u32 [#allocation13], 4
          %s497 = int_to_ptr.vmem [resolvable:$true] %s496
          %499 = dma.hbm_to_vmem [thread:$0]  %s9, 16, %s497, [#allocation14]
        $region44: #{tpu_custom_call.1} parent=11 // pred_fallthru
          _
        // Predicated region
        $region45: #{tpu_custom_call.1} parent=11 // pred_check
          %p500 = pneg %p286
        $region46: #{tpu_custom_call.1} parent=11 // pred_check_branch
          %502 = sbr.rel (%p500) target = $region48
        $region47: #{tpu_custom_call.1} parent=11 // pred_region
          _
        $region48: #{tpu_custom_call.1} parent=11 // pred_fallthru
          _
        // Predicated region
        $region49: #{tpu_custom_call.1} parent=11 // pred_check
          %p503 = pneg %p307
        $region50: #{tpu_custom_call.1} parent=11 // pred_check_branch
          %505 = sbr.rel (%p503) target = $region52
        $region51: #{tpu_custom_call.1} parent=11 // pred_region
          _
        $region52: #{tpu_custom_call.1} parent=11 // pred_fallthru
          _
        // Predicated region
        $region53: #{tpu_custom_call.1} parent=11 // pred_check
          %p506 = pneg %p328
        $region54: #{tpu_custom_call.1} parent=11 // pred_check_branch
          %508 = sbr.rel (%p506) target = $region56
        $region55: #{tpu_custom_call.1} parent=11 // pred_region
          %s510 = ssub.s32 256, 256
          %511 = vsyncadd [#allocation14], %s510
          %s512 = sshll.u32 [#allocation15], 4
          %s513 = int_to_ptr.vmem [resolvable:$true] %s512
          %518 = dma.hbm_to_vmem [thread:$0]  %s12, 256, %s513, [#allocation14], 64, 64, 4
        $region56: #{tpu_custom_call.1} parent=11 // pred_fallthru
          _
        // Predicated region
        $region57: #{tpu_custom_call.1} parent=11 // pred_check
          %p519 = pneg %p349
        $region58: #{tpu_custom_call.1} parent=11 // pred_check_branch
          %521 = sbr.rel (%p519) target = $region60
        $region59: #{tpu_custom_call.1} parent=11 // pred_region
          _
        $region60: #{tpu_custom_call.1} parent=11 // pred_fallthru
          _
        // Predicated region
        $region61: #{tpu_custom_call.1} parent=11 // pred_check
          %p522 = pneg %p370
        $region62: #{tpu_custom_call.1} parent=11 // pred_check_branch
          %524 = sbr.rel (%p522) target = $region64
        $region63: #{tpu_custom_call.1} parent=11 // pred_region
          _
        $region64: #{tpu_custom_call.1} parent=11 // pred_fallthru
          _
        // Predicated region
        $region65: #{tpu_custom_call.1} parent=11 // pred_check
          %p525 = pneg %p391
        $region66: #{tpu_custom_call.1} parent=11 // pred_check_branch
          %527 = sbr.rel (%p525) target = $region68
        $region67: #{tpu_custom_call.1} parent=11 // pred_region
          _
        $region68: #{tpu_custom_call.1} parent=11 // pred_fallthru
          _
      $region12: #{tpu_custom_call.1} parent=5 // pred_fallthru
        _
      %p528 = scmp.lt.s32.totalorder %s31, 4
      // Predicated region
      $region69: #{tpu_custom_call.1} parent=5 // pred_check
        %p529 = pneg %p528
      $region70: #{tpu_custom_call.1} parent=5 // pred_check_branch
        %531 = sbr.rel (%p529) target = $region72
      $region71: #{tpu_custom_call.1} parent=5 // pred_region
        // Predicated region
        $region73: #{tpu_custom_call.1} parent=71 // pred_check
          %p532 = pneg %p65
        $region74: #{tpu_custom_call.1} parent=71 // pred_check_branch
          %534 = sbr.rel (%p532) target = $region76
        $region75: #{tpu_custom_call.1} parent=71 // pred_region
          %p535 = scmp.lt.s32.totalorder %s38, 1
          %s536 = scalar_select %p535, %s38, 1
          %p537 = scmp.lt.s32.totalorder %s39, 1
          %s538 = scalar_select %p537, %s39, 1
          %s539 = smul.addr %s536, 2
          %s540 = sadd.s32 %s538, %s539
          %s541 = smul.addr %s540, 8
          %s542 = scalar_lea.vmem %s0, %s541
        $region76: #{tpu_custom_call.1} parent=71 // pred_fallthru
          _
        // Predicated region
        $region77: #{tpu_custom_call.1} parent=71 // pred_check
          %p543 = pneg %p91
        $region78: #{tpu_custom_call.1} parent=71 // pred_check_branch
          %545 = sbr.rel (%p543) target = $region80
        $region79: #{tpu_custom_call.1} parent=71 // pred_region
          %s546 = sand.u32 %s81, 1
          %s547 = scalar_lea.sflag [#allocation5], %s546
          %s548 = sand.u32 %s81, 1
          %s549 = smul.addr %s548, 16
          %s550 = scalar_lea.vmem [#allocation4], %s549
          %s552 = ssub.s32 256, 256
          %553 = vsyncadd %s547, %s552
          %s554 = smul.addr %s38, 2
          %s555 = smul.addr %s554, 128
          %s556 = scalar_lea.hbm %s1, %s555
          %s557 = sshll.u32 %s550, 4
          %s558 = int_to_ptr.vmem [resolvable:$true] %s557
          %563 = dma.hbm_to_vmem [thread:$0]  %s556, 256, %s558, %s547, 128, 128, 8
        $region80: #{tpu_custom_call.1} parent=71 // pred_fallthru
          _
      $region72: #{tpu_custom_call.1} parent=5 // pred_fallthru
        _
      %p564 = scmp.le.s32.totalorder 1, %s31
      %p565 = scmp.lt.s32.totalorder %s31, 5
      %p566 = pnand %p564, %p565
      %p567 = pneg %p566
      // Predicated region
      $region81: #{tpu_custom_call.1} parent=5 // pred_check
        _
      $region82: #{tpu_custom_call.1} parent=5 // pred_check_branch
        %569 = sbr.rel (%p566) target = $region84
      $region83: #{tpu_custom_call.1} parent=5 // pred_region
        %s570 = ssub.s32 %s31, 1
        %s571 = sand.u32 %s84, 1
        %s572 = scalar_lea.sflag [#allocation5], %s571
        %s573 = sand.u32 %s84, 1
        %s574 = smul.addr %s573, 16
        %s575 = scalar_lea.vmem [#allocation4], %s574
        // Predicated region
        $region85: #{tpu_custom_call.1} parent=83 // pred_check
          %p576 = pneg %p97
        $region86: #{tpu_custom_call.1} parent=83 // pred_check_branch
          %578 = sbr.rel (%p576) target = $region88
        $region87: #{tpu_custom_call.1} parent=83 // pred_region
          %579 = dma.done %s572, 256
        $region88: #{tpu_custom_call.1} parent=83 // pred_fallthru
          _
        // Predicated region
        $region89: #{tpu_custom_call.1} parent=83 // pred_check
          %p580 = pneg %p160
        $region90: #{tpu_custom_call.1} parent=83 // pred_check_branch
          %582 = sbr.rel (%p580) target = $region92
        $region91: #{tpu_custom_call.1} parent=83 // pred_region
          %583 = dma.done [#allocation8], 16
        $region92: #{tpu_custom_call.1} parent=83 // pred_fallthru
          _
        // Predicated region
        $region93: #{tpu_custom_call.1} parent=83 // pred_check
          %p584 = pneg %p181
        $region94: #{tpu_custom_call.1} parent=83 // pred_check_branch
          %586 = sbr.rel (%p584) target = $region96
        $region95: #{tpu_custom_call.1} parent=83 // pred_region
          %587 = dma.done [#allocation8], 16
        $region96: #{tpu_custom_call.1} parent=83 // pred_fallthru
          _
        // Predicated region
        $region97: #{tpu_custom_call.1} parent=83 // pred_check
          %p588 = pneg %p223
        $region98: #{tpu_custom_call.1} parent=83 // pred_check_branch
          %590 = sbr.rel (%p588) target = $region100
        $region99: #{tpu_custom_call.1} parent=83 // pred_region
          %591 = dma.done [#allocation11], 16
        $region100: #{tpu_custom_call.1} parent=83 // pred_fallthru
          _
        // Predicated region
        $region101: #{tpu_custom_call.1} parent=83 // pred_check
          %p592 = pneg %p244
        $region102: #{tpu_custom_call.1} parent=83 // pred_check_branch
          %594 = sbr.rel (%p592) target = $region104
        $region103: #{tpu_custom_call.1} parent=83 // pred_region
          %595 = dma.done [#allocation11], 256
        $region104: #{tpu_custom_call.1} parent=83 // pred_fallthru
          _
        // Predicated region
        $region105: #{tpu_custom_call.1} parent=83 // pred_check
          %p596 = pneg %p265
        $region106: #{tpu_custom_call.1} parent=83 // pred_check_branch
          %598 = sbr.rel (%p596) target = $region108
        $region107: #{tpu_custom_call.1} parent=83 // pred_region
          %599 = dma.done [#allocation14], 16
        $region108: #{tpu_custom_call.1} parent=83 // pred_fallthru
          _
        // Predicated region
        $region109: #{tpu_custom_call.1} parent=83 // pred_check
          %p600 = pneg %p328
        $region110: #{tpu_custom_call.1} parent=83 // pred_check_branch
          %602 = sbr.rel (%p600) target = $region112
        $region111: #{tpu_custom_call.1} parent=83 // pred_region
          %603 = dma.done [#allocation14], 256
        $region112: #{tpu_custom_call.1} parent=83 // pred_fallthru
          _
        %p604 = scmp.lt.s32.totalorder %s40, 1
        %s605 = scalar_select %p604, %s40, 1
        %p606 = scmp.lt.s32.totalorder %s41, 1
        %s607 = scalar_select %p606, %s41, 1
        %s608 = smul.addr %s605, 2
        %s609 = sadd.s32 %s607, %s608
        %s610 = smul.addr %s609, 8
        %s611 = scalar_lea.vmem %s0, %s610
        %p612 = pneg %p71
        %p613 = pneg %p68
        %s614 = sand.u32 %s84, 1
        %s615 = scalar_lea.sflag [#allocation5], %s614
        %s616 = sand.u32 %s84, 1
        %s617 = smul.addr %s616, 16
        %s618 = scalar_lea.vmem [#allocation4], %s617
        %p619 = pneg %p97
        %p620 = pneg %p94
        %p621 = pneg %p118
        %p622 = pneg %p115
        %p623 = pneg %p139
        %p624 = pneg %p136
        %p625 = pneg %p160
        %p626 = pneg %p157
        %p627 = pneg %p181
        %p628 = pneg %p178
        %p629 = pneg %p202
        %p630 = pneg %p199
        %p631 = pneg %p223
        %p632 = pneg %p220
        %p633 = pneg %p244
        %p634 = pneg %p241
        %p635 = pneg %p265
        %p636 = pneg %p262
        %p637 = pneg %p286
        %p638 = pneg %p283
        %p639 = pneg %p307
        %p640 = pneg %p304
        %p641 = pneg %p328
        %p642 = pneg %p325
        %p643 = pneg %p349
        %p644 = pneg %p346
        %p645 = pneg %p370
        %p646 = pneg %p367
        %p647 = pneg %p391
        %p648 = pneg %p388
        %p649 = pneg %p419
        %p650 = pneg %p416
        %s651 = sand.u32 %s406, 1
        %s652 = scalar_lea.sflag [#allocation6], %s651
        %s653 = sand.u32 %s406, 1
        %s654 = smul.addr %s653, 8
        %s655 = scalar_lea.vmem [#allocation16], %s654
        %p656 = scmp.lt.s32.totalorder %s40, 1
        %s657 = scalar_select %p656, %s40, 1
        %p658 = scmp.lt.s32.totalorder %s41, 1
        %s659 = scalar_select %p658, %s41, 1
        %s660 = smul.addr %s657, 2
        %s661 = sadd.s32 %s659, %s660
        %s662 = smul.addr %s661, 8
        %s663 = scalar_lea.vmem %s0, %s662
        %p665 = scmp.eq.s32.totalorder %s41, 0
        // Predicated region
        $region113: #{tpu_custom_call.1} parent=83 // pred_check
          %p666 = pneg %p665
        $region114: #{tpu_custom_call.1} parent=83 // pred_check_branch
          %668 = sbr.rel (%p666) target = $region116
        $region115: #{tpu_custom_call.1} parent=83 // pred_region
          %v669 = vld [vmem:[%s575] sm:$0xff]
          %v670 = vld [vmem:[%s575 + $0x8] sm:$0xff]
          %v671 = vld [vmem:[%s2] sm:$0x1]
          %v672 = vld [vmem:[%s3] sm:$0x1]
          %vm673 = vcmask 261120
          %v674 = vsel %vm673, %v669, 0.0
          %675 = vadd.xlane.f32.xlu0 %v674
          %v676 = vpop.xlane.xlu0 %675
          %v677 = vsel %vm673, %v670, 0.0
          %678 = vadd.xlane.f32.xlu0 %v677
          %v679 = vpop.xlane.xlu0 %678
          %v680 = vrcp.pop 32.0
          %v681 = vmul.f32 %v676, %v680
          %v682 = vmul.f32 %v679, %v680
          %v683 = vsub.f32 %v669, %v681
          %v684 = vsub.f32 %v670, %v682
          %v685 = vmul.f32 %v683, %v683
          %v686 = vmul.f32 %v684, %v684
          %v687 = vsel %vm673, %v685, 0.0
          %688 = vadd.xlane.f32.xlu0 %v687
          %v689 = vpop.xlane.xlu0 %688
          %v690 = vsel %vm673, %v686, 0.0
          %691 = vadd.xlane.f32.xlu0 %v690
          %v692 = vpop.xlane.xlu0 %691
          %v693 = vrcp.pop 31.0
          %v694 = vmul.f32 %v689, %v693
          %v695 = vmul.f32 %v692, %v693
          %v696 = vrsqrt.pop %v694
          %v697 = vmul.f32 %v694, %v696
          %vm698 = vcmp.eq.f32.partialorder %v694, inf
          %v699 = vsel %vm698, %v694, %v697
          %vm700 = vcmp.eq.f32.partialorder %v694, 0.0
          %v701 = vand.u32 %v694, 2147483648
          %v702 = vsel %vm700, %v701, %v699
          %v703 = vrsqrt.pop %v695
          %v704 = vmul.f32 %v695, %v703
          %vm705 = vcmp.eq.f32.partialorder %v695, inf
          %v706 = vsel %vm705, %v695, %v704
          %vm707 = vcmp.eq.f32.partialorder %v695, 0.0
          %v708 = vand.u32 %v695, 2147483648
          %v709 = vsel %vm707, %v708, %v706
          %v710 = vadd.f32 %v702, 1e-06
          %v711 = vadd.f32 %v709, 1e-06
          %v712 = vrcp.pop %v710
          %v713 = vrcp.pop %v711
          %v714 = vmul.f32 %v683, %v712
          %v715 = vmul.f32 %v684, %v713
          %v717 = vlaneseq
          %v718 = vshrl.u32 %v717, 7
          %v719 = vsub.s32 0, %v718
          %v720 = vrot.slane %v671, %v719
          %v722 = vmul.f32 %v720, %v714
          %v723 = vmul.f32 %v720, %v715
          %v725 = vlaneseq
          %v726 = vshrl.u32 %v725, 7
          %v727 = vsub.s32 0, %v726
          %v728 = vrot.slane %v672, %v727
          %v730 = vadd.f32 %v722, %v728
          %v731 = vadd.f32 %v723, %v728
          %v732 = vpack.c.bf16 %v731, %v730
          %v733 = vld [vmem:[#allocation12] sm:$0xf]
          %v734 = vld [vmem:[#allocation12 + $0x4] sm:$0xf]
          %v735 = vld [vmem:[#allocation12 + $0x8] sm:$0xf]
          %v736 = vld [vmem:[#allocation12 + $0xc] sm:$0xf]
          %v737 = vld [vmem:[#allocation13] sm:$0x1]
          %v739 = vlaneseq
          %v740 = vshrl.u32 %v739, 7
          %v741 = vsub.s32 0, %v740
          %v742 = vrot.slane %v737, %v741
          %v748 = vunpack.c.l.b16 %v733
          %v749 = vunpack.c.l.b16 %v734
          %v750 = vunpack.c.l.b16 %v735
          %v751 = vunpack.c.l.b16 %v736
          %v752 = vpack.c.b16 %v749, %v748
          %v753 = vpack.c.b16 %v751, %v750
          %v757 = vsel %vm673, %v732, 0
          %759 = vmatprep.subr.bf16.mxu0 0
          %760 = vmatpush1.bf16.msra.mxu0 %v752
          %761 = vmatprep.subr.bf16.mxu0 0
          %762 = vmatpush1.bf16.msra.mxu0 %v753
          %763 = vmatprep.subr.bf16.mxu0 0
          %764 = vmatpush1.bf16.msra.mxu0 0
          %765 = vmatprep.subr.bf16.mxu0 0
          %766 = vmatpush1.bf16.msra.mxu0 0
          %767 = vmatprep.subr.bf16.mxu0 0
          %768 = vmatpush1.bf16.msra.mxu0 0
          %769 = vmatprep.subr.bf16.mxu0 0
          %770 = vmatpush1.bf16.msra.mxu0 0
          %771 = vmatprep.subr.bf16.mxu0 0
          %772 = vmatpush1.bf16.msra.mxu0 0
          %773 = vmatprep.subr.bf16.mxu0 0
          %774 = vmatpush1.bf16.msra.mxu0 0
          %775 = vmatprep.subr.bf16.mxu0 0
          %776 = vmatpush1.bf16.msra.mxu0 0
          %777 = vmatprep.subr.bf16.mxu0 0
          %778 = vmatpush1.bf16.msra.mxu0 0
          %779 = vmatprep.subr.bf16.mxu0 0
          %780 = vmatpush1.bf16.msra.mxu0 0
          %781 = vmatprep.subr.bf16.mxu0 0
          %782 = vmatpush1.bf16.msra.mxu0 0
          %783 = vmatprep.subr.bf16.mxu0 0
          %784 = vmatpush1.bf16.msra.mxu0 0
          %785 = vmatprep.subr.bf16.mxu0 0
          %786 = vmatpush1.bf16.msra.mxu0 0
          %787 = vmatprep.subr.bf16.mxu0 0
          %788 = vmatpush1.bf16.msra.mxu0 0
          %789 = vmatprep.subr.bf16.mxu0 0
          %790 = vmatpush1.bf16.msra.mxu0 0
          %791 = vmatprep.mubr.bf16.mxu0 0
          %792 = vmatmul.mubr.bf16.gmra.mrb[0].mxu0 %v757
          %v793 = vpop.f32.mrb[0].mxu0
          %v794 = vadd.f32 %v742, %v793
          %v795 = vpop.f32.mrb[0].mxu0
          %v796 = vpop.f32.mrb[0].mxu0
          %v797 = vadd.f32 %v742, %v796
          %v798 = vpop.f32.mrb[0].mxu0
          %799 = vdwg.mxu0
          %v800 = vpack.c.bf16 %v797, %v794
          %801 = vst.msk [vmem:[#allocation2] sm:$0xff] %vm673, %v800
          %803 = vrot.lane.b32.xlu0 %v800, 96
          %v804 = vpop.permute.xlu0 %803
          %806 = vst.msk [vmem:[#allocation3] sm:$0xff] %vm673, %v804
        $region116: #{tpu_custom_call.1} parent=83 // pred_fallthru
          _
        %v807 = vld [vmem:[%s663] sm:$0xff]
        %v808 = vld [vmem:[%s2] sm:$0x1]
        %v809 = vld [vmem:[%s3] sm:$0x1]
        %vm810 = vcmask 261120
        %v811 = vsel %vm810, %v807, 0.0
        %812 = vadd.xlane.f32.xlu0 %v811
        %v813 = vpop.xlane.xlu0 %812
        %v814 = vrcp.pop 32.0
        %v815 = vmul.f32 %v813, %v814
        %v816 = vsub.f32 %v807, %v815
        %v817 = vmul.f32 %v816, %v816
        %v818 = vsel %vm810, %v817, 0.0
        %819 = vadd.xlane.f32.xlu0 %v818
        %v820 = vpop.xlane.xlu0 %819
        %v821 = vrcp.pop 31.0
        %v822 = vmul.f32 %v820, %v821
        %v823 = vrsqrt.pop %v822
        %v824 = vmul.f32 %v822, %v823
        %vm825 = vcmp.eq.f32.partialorder %v822, inf
        %v826 = vsel %vm825, %v822, %v824
        %vm827 = vcmp.eq.f32.partialorder %v822, 0.0
        %v828 = vand.u32 %v822, 2147483648
        %v829 = vsel %vm827, %v828, %v826
        %v830 = vadd.f32 %v829, 1e-06
        %v831 = vrcp.pop %v830
        %v832 = vmul.f32 %v816, %v831
        %v834 = vlaneseq
        %v835 = vshrl.u32 %v834, 7
        %v836 = vsub.s32 0, %v835
        %v837 = vrot.slane %v808, %v836
        %v839 = vmul.f32 %v837, %v832
        %v841 = vlaneseq
        %v842 = vshrl.u32 %v841, 7
        %v843 = vsub.s32 0, %v842
        %v844 = vrot.slane %v809, %v843
        %v846 = vadd.f32 %v839, %v844
        %v847 = vpack.c.bf16 %v846, %v846
        %v848 = vld [vmem:[%s6] sm:$0xf]
        %v849 = vld [vmem:[%s6 + $0x4] sm:$0xf]
        %v850 = vld [vmem:[%s6 + $0x8] sm:$0xf]
        %v851 = vld [vmem:[%s6 + $0xc] sm:$0xf]
        %v852 = vld [vmem:[#allocation10] sm:$0x1]
        %v854 = vlaneseq
        %v855 = vshrl.u32 %v854, 7
        %v856 = vsub.s32 0, %v855
        %v857 = vrot.slane %v852, %v856
        %v863 = vunpack.c.l.b16 %v848
        %v864 = vunpack.c.l.b16 %v849
        %v865 = vunpack.c.l.b16 %v850
        %v866 = vunpack.c.l.b16 %v851
        %v867 = vpack.c.b16 %v864, %v863
        %v868 = vpack.c.b16 %v866, %v865
        %v872 = vsel %vm810, %v847, 0
        %874 = vmatprep.subr.bf16.mxu0 0
        %875 = vmatpush1.bf16.msra.mxu0 %v867
        %876 = vmatprep.subr.bf16.mxu0 0
        %877 = vmatpush1.bf16.msra.mxu0 %v868
        %878 = vmatprep.subr.bf16.mxu0 0
        %879 = vmatpush1.bf16.msra.mxu0 0
        %880 = vmatprep.subr.bf16.mxu0 0
        %881 = vmatpush1.bf16.msra.mxu0 0
        %882 = vmatprep.subr.bf16.mxu0 0
        %883 = vmatpush1.bf16.msra.mxu0 0
        %884 = vmatprep.subr.bf16.mxu0 0
        %885 = vmatpush1.bf16.msra.mxu0 0
        %886 = vmatprep.subr.bf16.mxu0 0
        %887 = vmatpush1.bf16.msra.mxu0 0
        %888 = vmatprep.subr.bf16.mxu0 0
        %889 = vmatpush1.bf16.msra.mxu0 0
        %890 = vmatprep.subr.bf16.mxu0 0
        %891 = vmatpush1.bf16.msra.mxu0 0
        %892 = vmatprep.subr.bf16.mxu0 0
        %893 = vmatpush1.bf16.msra.mxu0 0
        %894 = vmatprep.subr.bf16.mxu0 0
        %895 = vmatpush1.bf16.msra.mxu0 0
        %896 = vmatprep.subr.bf16.mxu0 0
        %897 = vmatpush1.bf16.msra.mxu0 0
        %898 = vmatprep.subr.bf16.mxu0 0
        %899 = vmatpush1.bf16.msra.mxu0 0
        %900 = vmatprep.subr.bf16.mxu0 0
        %901 = vmatpush1.bf16.msra.mxu0 0
        %902 = vmatprep.subr.bf16.mxu0 0
        %903 = vmatpush1.bf16.msra.mxu0 0
        %904 = vmatprep.subr.bf16.mxu0 0
        %905 = vmatpush1.bf16.msra.mxu0 0
        %906 = vmatprep.mubr.bf16.mxu0 0
        %907 = vmatmul.mubr.bf16.gmra.mrb[0].mxu0 %v872
        %v908 = vpop.f32.mrb[0].mxu0
        %v909 = vadd.f32 %v857, %v908
        %v910 = vpop.f32.mrb[0].mxu0
        %v911 = vpop.f32.mrb[0].mxu0
        %v912 = vpop.f32.mrb[0].mxu0
        %913 = vdwg.mxu0
        %v914 = vpack.c.bf16 %v909, %v909
        %v915 = vld [vmem:[#allocation2] sm:$0xff]
        %v916 = vld [vmem:[#allocation3] sm:$0xff]
        %v917 = vld [vmem:[%s10] sm:$0xf]
        %v918 = vld [vmem:[%s10 + $0x4] sm:$0xf]
        %v919 = vld [vmem:[%s10 + $0x8] sm:$0xf]
        %v920 = vld [vmem:[%s10 + $0xc] sm:$0xf]
        %vm921 = vcmask 64512
        %v923 = vsel %vm921, %v914, 0
        %v926 = vsel %vm921, %v915, 0
        %928 = vmatprep.subr.bf16.mxu0 0
        %929 = vmatpush1.bf16.xpose.msra.mxu0 %v926
        %930 = vmatprep.subr.bf16.mxu0 0
        %931 = vmatpush1.bf16.xpose.msra.mxu0 0
        %932 = vmatprep.subr.bf16.mxu0 0
        %933 = vmatpush1.bf16.xpose.msra.mxu0 0
        %934 = vmatprep.subr.bf16.mxu0 0
        %935 = vmatpush1.bf16.xpose.msra.mxu0 0
        %936 = vmatprep.subr.bf16.mxu0 0
        %937 = vmatpush1.bf16.xpose.msra.mxu0 0
        %938 = vmatprep.subr.bf16.mxu0 0
        %939 = vmatpush1.bf16.xpose.msra.mxu0 0
        %940 = vmatprep.subr.bf16.mxu0 0
        %941 = vmatpush1.bf16.xpose.msra.mxu0 0
        %942 = vmatprep.subr.bf16.mxu0 0
        %943 = vmatpush1.bf16.xpose.msra.mxu0 0
        %944 = vmatprep.subr.bf16.mxu0 0
        %945 = vmatpush1.bf16.xpose.msra.mxu0 0
        %946 = vmatprep.subr.bf16.mxu0 0
        %947 = vmatpush1.bf16.xpose.msra.mxu0 0
        %948 = vmatprep.subr.bf16.mxu0 0
        %949 = vmatpush1.bf16.xpose.msra.mxu0 0
        %950 = vmatprep.subr.bf16.mxu0 0
        %951 = vmatpush1.bf16.xpose.msra.mxu0 0
        %952 = vmatprep.subr.bf16.mxu0 0
        %953 = vmatpush1.bf16.xpose.msra.mxu0 0
        %954 = vmatprep.subr.bf16.mxu0 0
        %955 = vmatpush1.bf16.xpose.msra.mxu0 0
        %956 = vmatprep.subr.bf16.mxu0 0
        %957 = vmatpush1.bf16.xpose.msra.mxu0 0
        %958 = vmatprep.subr.bf16.mxu0 0
        %959 = vmatpush1.bf16.xpose.msra.mxu0 0
        %960 = vmatprep.mubr.bf16.mxu0 0
        %961 = vmatmul.mubr.bf16.gmra.mrb[0].mxu0 %v923
        %v962 = vpop.f32.mrb[0].mxu0
        %v963 = vadd.f32 0.0, %v962
        %v964 = vpop.f32.mrb[0].mxu0
        %v965 = vpop.f32.mrb[0].mxu0
        %v966 = vpop.f32.mrb[0].mxu0
        %967 = vdwg.mxu0
        %v968 = vmul.f32 %v963, 0.35355338
        %vm969 = vcmask 130048
        %v970 = vsel %vm969, %v968, -inf
        %971 = vmax.xlane.f32.xlu0 %v970
        %v972 = vpop.xlane.xlu0 %971
        %v973 = vsub.f32 %v968, %v972
        %v974 = vmul.f32 %v973, 1.442695
        %v975 = vpow.pop %v974
        %v976 = vsel %vm969, %v975, 0.0
        %977 = vadd.xlane.f32.xlu0 %v976
        %v978 = vpop.xlane.xlu0 %977
        %v979 = vrcp.pop %v978
        %v980 = vmul.f32 %v975, %v979
        %v981 = vpack.c.bf16 %v980, %v980
        %v983 = vsel %vm969, %v981, 0
        %985 = vmatprep.subr.bf16.mxu0 0
        %986 = vmatpush1.bf16.msra.mxu0 %v916
        %987 = vmatprep.subr.bf16.mxu0 0
        %988 = vmatpush1.bf16.msra.mxu0 0
        %989 = vmatprep.subr.bf16.mxu0 0
        %990 = vmatpush1.bf16.msra.mxu0 0
        %991 = vmatprep.subr.bf16.mxu0 0
        %992 = vmatpush1.bf16.msra.mxu0 0
        %993 = vmatprep.subr.bf16.mxu0 0
        %994 = vmatpush1.bf16.msra.mxu0 0
        %995 = vmatprep.subr.bf16.mxu0 0
        %996 = vmatpush1.bf16.msra.mxu0 0
        %997 = vmatprep.subr.bf16.mxu0 0
        %998 = vmatpush1.bf16.msra.mxu0 0
        %999 = vmatprep.subr.bf16.mxu0 0
        %1000 = vmatpush1.bf16.msra.mxu0 0
        %1001 = vmatprep.subr.bf16.mxu0 0
        %1002 = vmatpush1.bf16.msra.mxu0 0
        %1003 = vmatprep.subr.bf16.mxu0 0
        %1004 = vmatpush1.bf16.msra.mxu0 0
        %1005 = vmatprep.subr.bf16.mxu0 0
        %1006 = vmatpush1.bf16.msra.mxu0 0
        %1007 = vmatprep.subr.bf16.mxu0 0
        %1008 = vmatpush1.bf16.msra.mxu0 0
        %1009 = vmatprep.subr.bf16.mxu0 0
        %1010 = vmatpush1.bf16.msra.mxu0 0
        %1011 = vmatprep.subr.bf16.mxu0 0
        %1012 = vmatpush1.bf16.msra.mxu0 0
        %1013 = vmatprep.subr.bf16.mxu0 0
        %1014 = vmatpush1.bf16.msra.mxu0 0
        %1015 = vmatprep.subr.bf16.mxu0 0
        %1016 = vmatpush1.bf16.msra.mxu0 0
        %1017 = vmatprep.mubr.bf16.mxu0 0
        %1018 = vmatmul.mubr.bf16.gmra.mrb[0].mxu0 %v983
        %v1019 = vpop.f32.mrb[0].mxu0
        %v1020 = vadd.f32 0.0, %v1019
        %v1021 = vpop.f32.mrb[0].mxu0
        %v1022 = vpop.f32.mrb[0].mxu0
        %v1023 = vpop.f32.mrb[0].mxu0
        %1024 = vdwg.mxu0
        %v1025 = vpack.c.bf16 %v1020, %v1020
        %1027 = vrot.lane.b32.xlu0 %v914, 120
        %v1028 = vpop.permute.xlu0 %1027
        %1030 = vrot.lane.b32.xlu0 %v915, 120
        %v1031 = vpop.permute.xlu0 %1030
        %v1033 = vsel %vm921, %v1028, 0
        %v1036 = vsel %vm921, %v1031, 0
        %1038 = vmatprep.subr.bf16.mxu0 0
        %1039 = vmatpush1.bf16.xpose.msra.mxu0 %v1036
        %1040 = vmatprep.subr.bf16.mxu0 0
        %1041 = vmatpush1.bf16.xpose.msra.mxu0 0
        %1042 = vmatprep.subr.bf16.mxu0 0
        %1043 = vmatpush1.bf16.xpose.msra.mxu0 0
        %1044 = vmatprep.subr.bf16.mxu0 0
        %1045 = vmatpush1.bf16.xpose.msra.mxu0 0
        %1046 = vmatprep.subr.bf16.mxu0 0
        %1047 = vmatpush1.bf16.xpose.msra.mxu0 0
        %1048 = vmatprep.subr.bf16.mxu0 0
        %1049 = vmatpush1.bf16.xpose.msra.mxu0 0
        %1050 = vmatprep.subr.bf16.mxu0 0
        %1051 = vmatpush1.bf16.xpose.msra.mxu0 0
        %1052 = vmatprep.subr.bf16.mxu0 0
        %1053 = vmatpush1.bf16.xpose.msra.mxu0 0
        %1054 = vmatprep.subr.bf16.mxu0 0
        %1055 = vmatpush1.bf16.xpose.msra.mxu0 0
        %1056 = vmatprep.subr.bf16.mxu0 0
        %1057 = vmatpush1.bf16.xpose.msra.mxu0 0
        %1058 = vmatprep.subr.bf16.mxu0 0
        %1059 = vmatpush1.bf16.xpose.msra.mxu0 0
        %1060 = vmatprep.subr.bf16.mxu0 0
        %1061 = vmatpush1.bf16.xpose.msra.mxu0 0
        %1062 = vmatprep.subr.bf16.mxu0 0
        %1063 = vmatpush1.bf16.xpose.msra.mxu0 0
        %1064 = vmatprep.subr.bf16.mxu0 0
        %1065 = vmatpush1.bf16.xpose.msra.mxu0 0
        %1066 = vmatprep.subr.bf16.mxu0 0
        %1067 = vmatpush1.bf16.xpose.msra.mxu0 0
        %1068 = vmatprep.subr.bf16.mxu0 0
        %1069 = vmatpush1.bf16.xpose.msra.mxu0 0
        %1070 = vmatprep.mubr.bf16.mxu0 0
        %1071 = vmatmul.mubr.bf16.gmra.mrb[0].mxu0 %v1033
        %v1072 = vpop.f32.mrb[0].mxu0
        %v1073 = vadd.f32 0.0, %v1072
        %v1074 = vpop.f32.mrb[0].mxu0
        %v1075 = vpop.f32.mrb[0].mxu0
        %v1076 = vpop.f32.mrb[0].mxu0
        %1077 = vdwg.mxu0
        %v1078 = vmul.f32 %v1073, 0.35355338
        %v1079 = vsel %vm969, %v1078, -inf
        %1080 = vmax.xlane.f32.xlu0 %v1079
        %v1081 = vpop.xlane.xlu0 %1080
        %v1082 = vsub.f32 %v1078, %v1081
        %v1083 = vmul.f32 %v1082, 1.442695
        %v1084 = vpow.pop %v1083
        %v1085 = vsel %vm969, %v1084, 0.0
        %1086 = vadd.xlane.f32.xlu0 %v1085
        %v1087 = vpop.xlane.xlu0 %1086
        %v1088 = vrcp.pop %v1087
        %v1089 = vmul.f32 %v1084, %v1088
        %v1090 = vpack.c.bf16 %v1089, %v1089
        %1092 = vrot.lane.b32.xlu0 %v916, 120
        %v1093 = vpop.permute.xlu0 %1092
        %v1096 = vsel %vm969, %v1090, 0
        %1098 = vmatprep.subr.bf16.mxu0 0
        %1099 = vmatpush1.bf16.msra.mxu0 %v1093
        %1100 = vmatprep.subr.bf16.mxu0 0
        %1101 = vmatpush1.bf16.msra.mxu0 0
        %1102 = vmatprep.subr.bf16.mxu0 0
        %1103 = vmatpush1.bf16.msra.mxu0 0
        %1104 = vmatprep.subr.bf16.mxu0 0
        %1105 = vmatpush1.bf16.msra.mxu0 0
        %1106 = vmatprep.subr.bf16.mxu0 0
        %1107 = vmatpush1.bf16.msra.mxu0 0
        %1108 = vmatprep.subr.bf16.mxu0 0
        %1109 = vmatpush1.bf16.msra.mxu0 0
        %1110 = vmatprep.subr.bf16.mxu0 0
        %1111 = vmatpush1.bf16.msra.mxu0 0
        %1112 = vmatprep.subr.bf16.mxu0 0
        %1113 = vmatpush1.bf16.msra.mxu0 0
        %1114 = vmatprep.subr.bf16.mxu0 0
        %1115 = vmatpush1.bf16.msra.mxu0 0
        %1116 = vmatprep.subr.bf16.mxu0 0
        %1117 = vmatpush1.bf16.msra.mxu0 0
        %1118 = vmatprep.subr.bf16.mxu0 0
        %1119 = vmatpush1.bf16.msra.mxu0 0
        %1120 = vmatprep.subr.bf16.mxu0 0
        %1121 = vmatpush1.bf16.msra.mxu0 0
        %1122 = vmatprep.subr.bf16.mxu0 0
        %1123 = vmatpush1.bf16.msra.mxu0 0
        %1124 = vmatprep.subr.bf16.mxu0 0
        %1125 = vmatpush1.bf16.msra.mxu0 0
        %1126 = vmatprep.subr.bf16.mxu0 0
        %1127 = vmatpush1.bf16.msra.mxu0 0
        %1128 = vmatprep.subr.bf16.mxu0 0
        %1129 = vmatpush1.bf16.msra.mxu0 0
        %1130 = vmatprep.mubr.bf16.mxu0 0
        %1131 = vmatmul.mubr.bf16.gmra.mrb[0].mxu0 %v1096
        %v1132 = vpop.f32.mrb[0].mxu0
        %v1133 = vadd.f32 0.0, %v1132
        %v1134 = vpop.f32.mrb[0].mxu0
        %v1135 = vpop.f32.mrb[0].mxu0
        %v1136 = vpop.f32.mrb[0].mxu0
        %1137 = vdwg.mxu0
        %v1138 = vpack.c.bf16 %v1133, %v1133
        %v1140 = vsel %vm921, %v1138, 0
        %vm1142 = vcmask 1043456
        %v1144 = vsel %vm1142, %v918, 0
        %1146 = vmatprep.subr.bf16.mxu0 0
        %1147 = vmatpush1.bf16.msra.mxu0 %v1144
        %1148 = vmatprep.subr.bf16.mxu0 0
        %1149 = vmatpush1.bf16.msra.mxu0 0
        %1150 = vmatprep.subr.bf16.mxu0 0
        %1151 = vmatpush1.bf16.msra.mxu0 0
        %1152 = vmatprep.subr.bf16.mxu0 0
        %1153 = vmatpush1.bf16.msra.mxu0 0
        %1154 = vmatprep.subr.bf16.mxu0 0
        %1155 = vmatpush1.bf16.msra.mxu0 0
        %1156 = vmatprep.subr.bf16.mxu0 0
        %1157 = vmatpush1.bf16.msra.mxu0 0
        %1158 = vmatprep.subr.bf16.mxu0 0
        %1159 = vmatpush1.bf16.msra.mxu0 0
        %1160 = vmatprep.subr.bf16.mxu0 0
        %1161 = vmatpush1.bf16.msra.mxu0 0
        %1162 = vmatprep.subr.bf16.mxu0 0
        %1163 = vmatpush1.bf16.msra.mxu0 0
        %1164 = vmatprep.subr.bf16.mxu0 0
        %1165 = vmatpush1.bf16.msra.mxu0 0
        %1166 = vmatprep.subr.bf16.mxu0 0
        %1167 = vmatpush1.bf16.msra.mxu0 0
        %1168 = vmatprep.subr.bf16.mxu0 0
        %1169 = vmatpush1.bf16.msra.mxu0 0
        %1170 = vmatprep.subr.bf16.mxu0 0
        %1171 = vmatpush1.bf16.msra.mxu0 0
        %1172 = vmatprep.subr.bf16.mxu0 0
        %1173 = vmatpush1.bf16.msra.mxu0 0
        %1174 = vmatprep.subr.bf16.mxu0 0
        %1175 = vmatpush1.bf16.msra.mxu0 0
        %1176 = vmatprep.subr.bf16.mxu0 0
        %1177 = vmatpush1.bf16.msra.mxu0 0
        %1178 = vmatprep.mubr.bf16.mxu0 0
        %1179 = vmatmul.mubr.bf16.gmra.mrb[0].mxu0 %v1140
        %v1180 = vpop.f32.mrb[0].mxu0
        %v1181 = vadd.f32 0.0, %v1180
        %v1182 = vpop.f32.mrb[0].mxu0
        %v1183 = vpop.f32.mrb[0].mxu0
        %v1184 = vpop.f32.mrb[0].mxu0
        %1185 = vdwg.mxu0
        %v1187 = vsel %vm921, %v1025, 0
        %v1190 = vsel %vm1142, %v917, 0
        %1192 = vmatprep.subr.bf16.mxu0 0
        %1193 = vmatpush1.bf16.msra.mxu0 %v1190
        %1194 = vmatprep.subr.bf16.mxu0 0
        %1195 = vmatpush1.bf16.msra.mxu0 0
        %1196 = vmatprep.subr.bf16.mxu0 0
        %1197 = vmatpush1.bf16.msra.mxu0 0
        %1198 = vmatprep.subr.bf16.mxu0 0
        %1199 = vmatpush1.bf16.msra.mxu0 0
        %1200 = vmatprep.subr.bf16.mxu0 0
        %1201 = vmatpush1.bf16.msra.mxu0 0
        %1202 = vmatprep.subr.bf16.mxu0 0
        %1203 = vmatpush1.bf16.msra.mxu0 0
        %1204 = vmatprep.subr.bf16.mxu0 0
        %1205 = vmatpush1.bf16.msra.mxu0 0
        %1206 = vmatprep.subr.bf16.mxu0 0
        %1207 = vmatpush1.bf16.msra.mxu0 0
        %1208 = vmatprep.subr.bf16.mxu0 0
        %1209 = vmatpush1.bf16.msra.mxu0 0
        %1210 = vmatprep.subr.bf16.mxu0 0
        %1211 = vmatpush1.bf16.msra.mxu0 0
        %1212 = vmatprep.subr.bf16.mxu0 0
        %1213 = vmatpush1.bf16.msra.mxu0 0
        %1214 = vmatprep.subr.bf16.mxu0 0
        %1215 = vmatpush1.bf16.msra.mxu0 0
        %1216 = vmatprep.subr.bf16.mxu0 0
        %1217 = vmatpush1.bf16.msra.mxu0 0
        %1218 = vmatprep.subr.bf16.mxu0 0
        %1219 = vmatpush1.bf16.msra.mxu0 0
        %1220 = vmatprep.subr.bf16.mxu0 0
        %1221 = vmatpush1.bf16.msra.mxu0 0
        %1222 = vmatprep.subr.bf16.mxu0 0
        %1223 = vmatpush1.bf16.msra.mxu0 0
        %1224 = vmatprep.mubr.bf16.mxu0 0
        %1225 = vmatmul.mubr.bf16.gmra.mrb[0].mxu0 %v1187
        %v1226 = vpop.f32.mrb[0].mxu0
        %v1227 = vadd.f32 %v1181, %v1226
        %v1228 = vpop.f32.mrb[0].mxu0
        %v1229 = vpop.f32.mrb[0].mxu0
        %v1230 = vpop.f32.mrb[0].mxu0
        %1231 = vdwg.mxu0
        %1232 = vrot.lane.b32.xlu0 %v914, 112
        %v1233 = vpop.permute.xlu0 %1232
        %1234 = vrot.lane.b32.xlu0 %v915, 112
        %v1235 = vpop.permute.xlu0 %1234
        %v1237 = vsel %vm921, %v1233, 0
        %v1240 = vsel %vm921, %v1235, 0
        %1242 = vmatprep.subr.bf16.mxu0 0
        %1243 = vmatpush1.bf16.xpose.msra.mxu0 %v1240
        %1244 = vmatprep.subr.bf16.mxu0 0
        %1245 = vmatpush1.bf16.xpose.msra.mxu0 0
        %1246 = vmatprep.subr.bf16.mxu0 0
        %1247 = vmatpush1.bf16.xpose.msra.mxu0 0
        %1248 = vmatprep.subr.bf16.mxu0 0
        %1249 = vmatpush1.bf16.xpose.msra.mxu0 0
        %1250 = vmatprep.subr.bf16.mxu0 0
        %1251 = vmatpush1.bf16.xpose.msra.mxu0 0
        %1252 = vmatprep.subr.bf16.mxu0 0
        %1253 = vmatpush1.bf16.xpose.msra.mxu0 0
        %1254 = vmatprep.subr.bf16.mxu0 0
        %1255 = vmatpush1.bf16.xpose.msra.mxu0 0
        %1256 = vmatprep.subr.bf16.mxu0 0
        %1257 = vmatpush1.bf16.xpose.msra.mxu0 0
        %1258 = vmatprep.subr.bf16.mxu0 0
        %1259 = vmatpush1.bf16.xpose.msra.mxu0 0
        %1260 = vmatprep.subr.bf16.mxu0 0
        %1261 = vmatpush1.bf16.xpose.msra.mxu0 0
        %1262 = vmatprep.subr.bf16.mxu0 0
        %1263 = vmatpush1.bf16.xpose.msra.mxu0 0
        %1264 = vmatprep.subr.bf16.mxu0 0
        %1265 = vmatpush1.bf16.xpose.msra.mxu0 0
        %1266 = vmatprep.subr.bf16.mxu0 0
        %1267 = vmatpush1.bf16.xpose.msra.mxu0 0
        %1268 = vmatprep.subr.bf16.mxu0 0
        %1269 = vmatpush1.bf16.xpose.msra.mxu0 0
        %1270 = vmatprep.subr.bf16.mxu0 0
        %1271 = vmatpush1.bf16.xpose.msra.mxu0 0
        %1272 = vmatprep.subr.bf16.mxu0 0
        %1273 = vmatpush1.bf16.xpose.msra.mxu0 0
        %1274 = vmatprep.mubr.bf16.mxu0 0
        %1275 = vmatmul.mubr.bf16.gmra.mrb[0].mxu0 %v1237
        %v1276 = vpop.f32.mrb[0].mxu0
        %v1277 = vadd.f32 0.0, %v1276
        %v1278 = vpop.f32.mrb[0].mxu0
        %v1279 = vpop.f32.mrb[0].mxu0
        %v1280 = vpop.f32.mrb[0].mxu0
        %1281 = vdwg.mxu0
        %v1282 = vmul.f32 %v1277, 0.35355338
        %v1283 = vsel %vm969, %v1282, -inf
        %1284 = vmax.xlane.f32.xlu0 %v1283
        %v1285 = vpop.xlane.xlu0 %1284
        %v1286 = vsub.f32 %v1282, %v1285
        %v1287 = vmul.f32 %v1286, 1.442695
        %v1288 = vpow.pop %v1287
        %v1289 = vsel %vm969, %v1288, 0.0
        %1290 = vadd.xlane.f32.xlu0 %v1289
        %v1291 = vpop.xlane.xlu0 %1290
        %v1292 = vrcp.pop %v1291
        %v1293 = vmul.f32 %v1288, %v1292
        %v1294 = vpack.c.bf16 %v1293, %v1293
        %1295 = vrot.lane.b32.xlu0 %v916, 112
        %v1296 = vpop.permute.xlu0 %1295
        %v1299 = vsel %vm969, %v1294, 0
        %1301 = vmatprep.subr.bf16.mxu0 0
        %1302 = vmatpush1.bf16.msra.mxu0 %v1296
        %1303 = vmatprep.subr.bf16.mxu0 0
        %1304 = vmatpush1.bf16.msra.mxu0 0
        %1305 = vmatprep.subr.bf16.mxu0 0
        %1306 = vmatpush1.bf16.msra.mxu0 0
        %1307 = vmatprep.subr.bf16.mxu0 0
        %1308 = vmatpush1.bf16.msra.mxu0 0
        %1309 = vmatprep.subr.bf16.mxu0 0
        %1310 = vmatpush1.bf16.msra.mxu0 0
        %1311 = vmatprep.subr.bf16.mxu0 0
        %1312 = vmatpush1.bf16.msra.mxu0 0
        %1313 = vmatprep.subr.bf16.mxu0 0
        %1314 = vmatpush1.bf16.msra.mxu0 0
        %1315 = vmatprep.subr.bf16.mxu0 0
        %1316 = vmatpush1.bf16.msra.mxu0 0
        %1317 = vmatprep.subr.bf16.mxu0 0
        %1318 = vmatpush1.bf16.msra.mxu0 0
        %1319 = vmatprep.subr.bf16.mxu0 0
        %1320 = vmatpush1.bf16.msra.mxu0 0
        %1321 = vmatprep.subr.bf16.mxu0 0
        %1322 = vmatpush1.bf16.msra.mxu0 0
        %1323 = vmatprep.subr.bf16.mxu0 0
        %1324 = vmatpush1.bf16.msra.mxu0 0
        %1325 = vmatprep.subr.bf16.mxu0 0
        %1326 = vmatpush1.bf16.msra.mxu0 0
        %1327 = vmatprep.subr.bf16.mxu0 0
        %1328 = vmatpush1.bf16.msra.mxu0 0
        %1329 = vmatprep.subr.bf16.mxu0 0
        %1330 = vmatpush1.bf16.msra.mxu0 0
        %1331 = vmatprep.subr.bf16.mxu0 0
        %1332 = vmatpush1.bf16.msra.mxu0 0
        %1333 = vmatprep.mubr.bf16.mxu0 0
        %1334 = vmatmul.mubr.bf16.gmra.mrb[0].mxu0 %v1299
        %v1335 = vpop.f32.mrb[0].mxu0
        %v1336 = vadd.f32 0.0, %v1335
        %v1337 = vpop.f32.mrb[0].mxu0
        %v1338 = vpop.f32.mrb[0].mxu0
        %v1339 = vpop.f32.mrb[0].mxu0
        %1340 = vdwg.mxu0
        %v1341 = vpack.c.bf16 %v1336, %v1336
        %v1343 = vsel %vm921, %v1341, 0
        %v1346 = vsel %vm1142, %v919, 0
        %1348 = vmatprep.subr.bf16.mxu0 0
        %1349 = vmatpush1.bf16.msra.mxu0 %v1346
        %1350 = vmatprep.subr.bf16.mxu0 0
        %1351 = vmatpush1.bf16.msra.mxu0 0
        %1352 = vmatprep.subr.bf16.mxu0 0
        %1353 = vmatpush1.bf16.msra.mxu0 0
        %1354 = vmatprep.subr.bf16.mxu0 0
        %1355 = vmatpush1.bf16.msra.mxu0 0
        %1356 = vmatprep.subr.bf16.mxu0 0
        %1357 = vmatpush1.bf16.msra.mxu0 0
        %1358 = vmatprep.subr.bf16.mxu0 0
        %1359 = vmatpush1.bf16.msra.mxu0 0
        %1360 = vmatprep.subr.bf16.mxu0 0
        %1361 = vmatpush1.bf16.msra.mxu0 0
        %1362 = vmatprep.subr.bf16.mxu0 0
        %1363 = vmatpush1.bf16.msra.mxu0 0
        %1364 = vmatprep.subr.bf16.mxu0 0
        %1365 = vmatpush1.bf16.msra.mxu0 0
        %1366 = vmatprep.subr.bf16.mxu0 0
        %1367 = vmatpush1.bf16.msra.mxu0 0
        %1368 = vmatprep.subr.bf16.mxu0 0
        %1369 = vmatpush1.bf16.msra.mxu0 0
        %1370 = vmatprep.subr.bf16.mxu0 0
        %1371 = vmatpush1.bf16.msra.mxu0 0
        %1372 = vmatprep.subr.bf16.mxu0 0
        %1373 = vmatpush1.bf16.msra.mxu0 0
        %1374 = vmatprep.subr.bf16.mxu0 0
        %1375 = vmatpush1.bf16.msra.mxu0 0
        %1376 = vmatprep.subr.bf16.mxu0 0
        %1377 = vmatpush1.bf16.msra.mxu0 0
        %1378 = vmatprep.subr.bf16.mxu0 0
        %1379 = vmatpush1.bf16.msra.mxu0 0
        %1380 = vmatprep.mubr.bf16.mxu0 0
        %1381 = vmatmul.mubr.bf16.gmra.mrb[0].mxu0 %v1343
        %v1382 = vpop.f32.mrb[0].mxu0
        %v1383 = vadd.f32 0.0, %v1382
        %v1384 = vpop.f32.mrb[0].mxu0
        %v1385 = vpop.f32.mrb[0].mxu0
        %v1386 = vpop.f32.mrb[0].mxu0
        %1387 = vdwg.mxu0
        %v1388 = vadd.f32 %v1227, %v1383
        %1389 = vrot.lane.b32.xlu0 %v914, 104
        %v1390 = vpop.permute.xlu0 %1389
        %1391 = vrot.lane.b32.xlu0 %v915, 104
        %v1392 = vpop.permute.xlu0 %1391
        %v1394 = vsel %vm921, %v1390, 0
        %v1397 = vsel %vm921, %v1392, 0
        %1399 = vmatprep.subr.bf16.mxu0 0
        %1400 = vmatpush1.bf16.xpose.msra.mxu0 %v1397
        %1401 = vmatprep.subr.bf16.mxu0 0
        %1402 = vmatpush1.bf16.xpose.msra.mxu0 0
        %1403 = vmatprep.subr.bf16.mxu0 0
        %1404 = vmatpush1.bf16.xpose.msra.mxu0 0
        %1405 = vmatprep.subr.bf16.mxu0 0
        %1406 = vmatpush1.bf16.xpose.msra.mxu0 0
        %1407 = vmatprep.subr.bf16.mxu0 0
        %1408 = vmatpush1.bf16.xpose.msra.mxu0 0
        %1409 = vmatprep.subr.bf16.mxu0 0
        %1410 = vmatpush1.bf16.xpose.msra.mxu0 0
        %1411 = vmatprep.subr.bf16.mxu0 0
        %1412 = vmatpush1.bf16.xpose.msra.mxu0 0
        %1413 = vmatprep.subr.bf16.mxu0 0
        %1414 = vmatpush1.bf16.xpose.msra.mxu0 0
        %1415 = vmatprep.subr.bf16.mxu0 0
        %1416 = vmatpush1.bf16.xpose.msra.mxu0 0
        %1417 = vmatprep.subr.bf16.mxu0 0
        %1418 = vmatpush1.bf16.xpose.msra.mxu0 0
        %1419 = vmatprep.subr.bf16.mxu0 0
        %1420 = vmatpush1.bf16.xpose.msra.mxu0 0
        %1421 = vmatprep.subr.bf16.mxu0 0
        %1422 = vmatpush1.bf16.xpose.msra.mxu0 0
        %1423 = vmatprep.subr.bf16.mxu0 0
        %1424 = vmatpush1.bf16.xpose.msra.mxu0 0
        %1425 = vmatprep.subr.bf16.mxu0 0
        %1426 = vmatpush1.bf16.xpose.msra.mxu0 0
        %1427 = vmatprep.subr.bf16.mxu0 0
        %1428 = vmatpush1.bf16.xpose.msra.mxu0 0
        %1429 = vmatprep.subr.bf16.mxu0 0
        %1430 = vmatpush1.bf16.xpose.msra.mxu0 0
        %1431 = vmatprep.mubr.bf16.mxu0 0
        %1432 = vmatmul.mubr.bf16.gmra.mrb[0].mxu0 %v1394
        %v1433 = vpop.f32.mrb[0].mxu0
        %v1434 = vadd.f32 0.0, %v1433
        %v1435 = vpop.f32.mrb[0].mxu0
        %v1436 = vpop.f32.mrb[0].mxu0
        %v1437 = vpop.f32.mrb[0].mxu0
        %1438 = vdwg.mxu0
        %v1439 = vmul.f32 %v1434, 0.35355338
        %v1440 = vsel %vm969, %v1439, -inf
        %1441 = vmax.xlane.f32.xlu0 %v1440
        %v1442 = vpop.xlane.xlu0 %1441
        %v1443 = vsub.f32 %v1439, %v1442
        %v1444 = vmul.f32 %v1443, 1.442695
        %v1445 = vpow.pop %v1444
        %v1446 = vsel %vm969, %v1445, 0.0
        %1447 = vadd.xlane.f32.xlu0 %v1446
        %v1448 = vpop.xlane.xlu0 %1447
        %v1449 = vrcp.pop %v1448
        %v1450 = vmul.f32 %v1445, %v1449
        %v1451 = vpack.c.bf16 %v1450, %v1450
        %1452 = vrot.lane.b32.xlu0 %v916, 104
        %v1453 = vpop.permute.xlu0 %1452
        %v1456 = vsel %vm969, %v1451, 0
        %1458 = vmatprep.subr.bf16.mxu0 0
        %1459 = vmatpush1.bf16.msra.mxu0 %v1453
        %1460 = vmatprep.subr.bf16.mxu0 0
        %1461 = vmatpush1.bf16.msra.mxu0 0
        %1462 = vmatprep.subr.bf16.mxu0 0
        %1463 = vmatpush1.bf16.msra.mxu0 0
        %1464 = vmatprep.subr.bf16.mxu0 0
        %1465 = vmatpush1.bf16.msra.mxu0 0
        %1466 = vmatprep.subr.bf16.mxu0 0
        %1467 = vmatpush1.bf16.msra.mxu0 0
        %1468 = vmatprep.subr.bf16.mxu0 0
        %1469 = vmatpush1.bf16.msra.mxu0 0
        %1470 = vmatprep.subr.bf16.mxu0 0
        %1471 = vmatpush1.bf16.msra.mxu0 0
        %1472 = vmatprep.subr.bf16.mxu0 0
        %1473 = vmatpush1.bf16.msra.mxu0 0
        %1474 = vmatprep.subr.bf16.mxu0 0
        %1475 = vmatpush1.bf16.msra.mxu0 0
        %1476 = vmatprep.subr.bf16.mxu0 0
        %1477 = vmatpush1.bf16.msra.mxu0 0
        %1478 = vmatprep.subr.bf16.mxu0 0
        %1479 = vmatpush1.bf16.msra.mxu0 0
        %1480 = vmatprep.subr.bf16.mxu0 0
        %1481 = vmatpush1.bf16.msra.mxu0 0
        %1482 = vmatprep.subr.bf16.mxu0 0
        %1483 = vmatpush1.bf16.msra.mxu0 0
        %1484 = vmatprep.subr.bf16.mxu0 0
        %1485 = vmatpush1.bf16.msra.mxu0 0
        %1486 = vmatprep.subr.bf16.mxu0 0
        %1487 = vmatpush1.bf16.msra.mxu0 0
        %1488 = vmatprep.subr.bf16.mxu0 0
        %1489 = vmatpush1.bf16.msra.mxu0 0
        %1490 = vmatprep.mubr.bf16.mxu0 0
        %1491 = vmatmul.mubr.bf16.gmra.mrb[0].mxu0 %v1456
        %v1492 = vpop.f32.mrb[0].mxu0
        %v1493 = vadd.f32 0.0, %v1492
        %v1494 = vpop.f32.mrb[0].mxu0
        %v1495 = vpop.f32.mrb[0].mxu0
        %v1496 = vpop.f32.mrb[0].mxu0
        %1497 = vdwg.mxu0
        %v1498 = vpack.c.bf16 %v1493, %v1493
        %v1500 = vsel %vm921, %v1498, 0
        %v1503 = vsel %vm1142, %v920, 0
        %1505 = vmatprep.subr.bf16.mxu0 0
        %1506 = vmatpush1.bf16.msra.mxu0 %v1503
        %1507 = vmatprep.subr.bf16.mxu0 0
        %1508 = vmatpush1.bf16.msra.mxu0 0
        %1509 = vmatprep.subr.bf16.mxu0 0
        %1510 = vmatpush1.bf16.msra.mxu0 0
        %1511 = vmatprep.subr.bf16.mxu0 0
        %1512 = vmatpush1.bf16.msra.mxu0 0
        %1513 = vmatprep.subr.bf16.mxu0 0
        %1514 = vmatpush1.bf16.msra.mxu0 0
        %1515 = vmatprep.subr.bf16.mxu0 0
        %1516 = vmatpush1.bf16.msra.mxu0 0
        %1517 = vmatprep.subr.bf16.mxu0 0
        %1518 = vmatpush1.bf16.msra.mxu0 0
        %1519 = vmatprep.subr.bf16.mxu0 0
        %1520 = vmatpush1.bf16.msra.mxu0 0
        %1521 = vmatprep.subr.bf16.mxu0 0
        %1522 = vmatpush1.bf16.msra.mxu0 0
        %1523 = vmatprep.subr.bf16.mxu0 0
        %1524 = vmatpush1.bf16.msra.mxu0 0
        %1525 = vmatprep.subr.bf16.mxu0 0
        %1526 = vmatpush1.bf16.msra.mxu0 0
        %1527 = vmatprep.subr.bf16.mxu0 0
        %1528 = vmatpush1.bf16.msra.mxu0 0
        %1529 = vmatprep.subr.bf16.mxu0 0
        %1530 = vmatpush1.bf16.msra.mxu0 0
        %1531 = vmatprep.subr.bf16.mxu0 0
        %1532 = vmatpush1.bf16.msra.mxu0 0
        %1533 = vmatprep.subr.bf16.mxu0 0
        %1534 = vmatpush1.bf16.msra.mxu0 0
        %1535 = vmatprep.subr.bf16.mxu0 0
        %1536 = vmatpush1.bf16.msra.mxu0 0
        %1537 = vmatprep.mubr.bf16.mxu0 0
        %1538 = vmatmul.mubr.bf16.gmra.mrb[0].mxu0 %v1500
        %v1539 = vpop.f32.mrb[0].mxu0
        %v1540 = vadd.f32 0.0, %v1539
        %v1541 = vpop.f32.mrb[0].mxu0
        %v1542 = vpop.f32.mrb[0].mxu0
        %v1543 = vpop.f32.mrb[0].mxu0
        %1544 = vdwg.mxu0
        %v1545 = vadd.f32 %v1388, %v1540
        %v1546 = vld [vmem:[%s11] sm:$0x1]
        %v1548 = vlaneseq
        %v1549 = vshrl.u32 %v1548, 7
        %v1550 = vsub.s32 0, %v1549
        %v1551 = vrot.slane %v1546, %v1550
        %v1553 = vadd.f32 %v1545, %v1551
        %v1554 = vadd.f32 %v807, %v1553
        %v1555 = vld [vmem:[#allocation7] sm:$0x1]
        %v1556 = vld [vmem:[#allocation9] sm:$0x1]
        %v1557 = vsel %vm810, %v1554, 0.0
        %1558 = vadd.xlane.f32.xlu0 %v1557
        %v1559 = vpop.xlane.xlu0 %1558
        %v1560 = vmul.f32 %v1559, %v814
        %v1561 = vsub.f32 %v1554, %v1560
        %v1562 = vmul.f32 %v1561, %v1561
        %v1563 = vsel %vm810, %v1562, 0.0
        %1564 = vadd.xlane.f32.xlu0 %v1563
        %v1565 = vpop.xlane.xlu0 %1564
        %v1566 = vmul.f32 %v1565, %v821
        %v1567 = vrsqrt.pop %v1566
        %v1568 = vmul.f32 %v1566, %v1567
        %vm1569 = vcmp.eq.f32.partialorder %v1566, inf
        %v1570 = vsel %vm1569, %v1566, %v1568
        %vm1571 = vcmp.eq.f32.partialorder %v1566, 0.0
        %v1572 = vand.u32 %v1566, 2147483648
        %v1573 = vsel %vm1571, %v1572, %v1570
        %v1574 = vadd.f32 %v1573, 1e-06
        %v1575 = vrcp.pop %v1574
        %v1576 = vmul.f32 %v1561, %v1575
        %v1578 = vlaneseq
        %v1579 = vshrl.u32 %v1578, 7
        %v1580 = vsub.s32 0, %v1579
        %v1581 = vrot.slane %v1555, %v1580
        %v1583 = vmul.f32 %v1581, %v1576
        %v1585 = vlaneseq
        %v1586 = vshrl.u32 %v1585, 7
        %v1587 = vsub.s32 0, %v1586
        %v1588 = vrot.slane %v1556, %v1587
        %v1590 = vadd.f32 %v1583, %v1588
        %v1591 = vpack.c.bf16 %v1590, %v1590
        %v1592 = vld [vmem:[#allocation15] sm:$0xf]
        %v1593 = vld [vmem:[#allocation15 + $0x4] sm:$0xf]
        %v1594 = vld [vmem:[#allocation15 + $0x8] sm:$0xf]
        %v1595 = vld [vmem:[#allocation15 + $0xc] sm:$0xf]
        %v1596 = vld [vmem:[%s13] sm:$0x1]
        %v1598 = vlaneseq
        %v1599 = vshrl.u32 %v1598, 7
        %v1600 = vsub.s32 0, %v1599
        %v1601 = vrot.slane %v1596, %v1600
        %v1607 = vunpack.c.l.b16 %v1592
        %v1608 = vunpack.c.l.b16 %v1593
        %v1609 = vunpack.c.l.b16 %v1594
        %v1610 = vunpack.c.l.b16 %v1595
        %v1611 = vpack.c.b16 %v1608, %v1607
        %v1612 = vpack.c.b16 %v1610, %v1609
        %v1616 = vsel %vm810, %v1591, 0
        %1618 = vmatprep.subr.bf16.mxu0 0
        %1619 = vmatpush1.bf16.msra.mxu0 %v1611
        %1620 = vmatprep.subr.bf16.mxu0 0
        %1621 = vmatpush1.bf16.msra.mxu0 %v1612
        %1622 = vmatprep.subr.bf16.mxu0 0
        %1623 = vmatpush1.bf16.msra.mxu0 0
        %1624 = vmatprep.subr.bf16.mxu0 0
        %1625 = vmatpush1.bf16.msra.mxu0 0
        %1626 = vmatprep.subr.bf16.mxu0 0
        %1627 = vmatpush1.bf16.msra.mxu0 0
        %1628 = vmatprep.subr.bf16.mxu0 0
        %1629 = vmatpush1.bf16.msra.mxu0 0
        %1630 = vmatprep.subr.bf16.mxu0 0
        %1631 = vmatpush1.bf16.msra.mxu0 0
        %1632 = vmatprep.subr.bf16.mxu0 0
        %1633 = vmatpush1.bf16.msra.mxu0 0
        %1634 = vmatprep.subr.bf16.mxu0 0
        %1635 = vmatpush1.bf16.msra.mxu0 0
        %1636 = vmatprep.subr.bf16.mxu0 0
        %1637 = vmatpush1.bf16.msra.mxu0 0
        %1638 = vmatprep.subr.bf16.mxu0 0
        %1639 = vmatpush1.bf16.msra.mxu0 0
        %1640 = vmatprep.subr.bf16.mxu0 0
        %1641 = vmatpush1.bf16.msra.mxu0 0
        %1642 = vmatprep.subr.bf16.mxu0 0
        %1643 = vmatpush1.bf16.msra.mxu0 0
        %1644 = vmatprep.subr.bf16.mxu0 0
        %1645 = vmatpush1.bf16.msra.mxu0 0
        %1646 = vmatprep.subr.bf16.mxu0 0
        %1647 = vmatpush1.bf16.msra.mxu0 0
        %1648 = vmatprep.subr.bf16.mxu0 0
        %1649 = vmatpush1.bf16.msra.mxu0 0
        %1650 = vmatprep.mubr.bf16.mxu0 0
        %1651 = vmatmul.mubr.bf16.gmra.mrb[0].mxu0 %v1616
        %v1652 = vpop.f32.mrb[0].mxu0
        %v1653 = vadd.f32 %v1601, %v1652
        %v1654 = vpop.f32.mrb[0].mxu0
        %v1655 = vpop.f32.mrb[0].mxu0
        %v1656 = vpop.f32.mrb[0].mxu0
        %1657 = vdwg.mxu0
        %v1658 = vmax.f32 %v1653, 0.0
        %v1659 = vpack.c.bf16 %v1658, %v1658
        %v1660 = vld [vmem:[%s14] sm:$0xf]
        %v1661 = vld [vmem:[%s14 + $0x4] sm:$0xf]
        %v1662 = vld [vmem:[%s14 + $0x8] sm:$0xf]
        %v1663 = vld [vmem:[%s14 + $0xc] sm:$0xf]
        %v1664 = vld [vmem:[%s14 + $0x10] sm:$0xf]
        %v1665 = vld [vmem:[%s14 + $0x14] sm:$0xf]
        %v1666 = vld [vmem:[%s14 + $0x18] sm:$0xf]
        %v1667 = vld [vmem:[%s14 + $0x1c] sm:$0xf]
        %v1668 = vld [vmem:[%s15] sm:$0x1]
        %v1670 = vlaneseq
        %v1671 = vshrl.u32 %v1670, 7
        %v1672 = vsub.s32 0, %v1671
        %v1673 = vrot.slane %v1668, %v1672
        %v1683 = vunpack.c.l.b16 %v1660
        %v1684 = vunpack.c.l.b16 %v1661
        %v1685 = vunpack.c.l.b16 %v1662
        %v1686 = vunpack.c.l.b16 %v1663
        %v1687 = vunpack.c.l.b16 %v1664
        %v1688 = vunpack.c.l.b16 %v1665
        %v1689 = vunpack.c.l.b16 %v1666
        %v1690 = vunpack.c.l.b16 %v1667
        %v1691 = vpack.c.b16 %v1684, %v1683
        %v1692 = vpack.c.b16 %v1686, %v1685
        %v1693 = vpack.c.b16 %v1688, %v1687
        %v1694 = vpack.c.b16 %v1690, %v1689
        %vm1699 = vcmask 523264
        %v1701 = vsel %vm1699, %v1659, 0
        %1703 = vmatprep.subr.bf16.mxu0 0
        %1704 = vmatpush1.bf16.msra.mxu0 %v1691
        %1705 = vmatprep.subr.bf16.mxu0 0
        %1706 = vmatpush1.bf16.msra.mxu0 %v1692
        %1707 = vmatprep.subr.bf16.mxu0 0
        %1708 = vmatpush1.bf16.msra.mxu0 %v1693
        %1709 = vmatprep.subr.bf16.mxu0 0
        %1710 = vmatpush1.bf16.msra.mxu0 %v1694
        %1711 = vmatprep.subr.bf16.mxu0 0
        %1712 = vmatpush1.bf16.msra.mxu0 0
        %1713 = vmatprep.subr.bf16.mxu0 0
        %1714 = vmatpush1.bf16.msra.mxu0 0
        %1715 = vmatprep.subr.bf16.mxu0 0
        %1716 = vmatpush1.bf16.msra.mxu0 0
        %1717 = vmatprep.subr.bf16.mxu0 0
        %1718 = vmatpush1.bf16.msra.mxu0 0
        %1719 = vmatprep.subr.bf16.mxu0 0
        %1720 = vmatpush1.bf16.msra.mxu0 0
        %1721 = vmatprep.subr.bf16.mxu0 0
        %1722 = vmatpush1.bf16.msra.mxu0 0
        %1723 = vmatprep.subr.bf16.mxu0 0
        %1724 = vmatpush1.bf16.msra.mxu0 0
        %1725 = vmatprep.subr.bf16.mxu0 0
        %1726 = vmatpush1.bf16.msra.mxu0 0
        %1727 = vmatprep.subr.bf16.mxu0 0
        %1728 = vmatpush1.bf16.msra.mxu0 0
        %1729 = vmatprep.subr.bf16.mxu0 0
        %1730 = vmatpush1.bf16.msra.mxu0 0
        %1731 = vmatprep.subr.bf16.mxu0 0
        %1732 = vmatpush1.bf16.msra.mxu0 0
        %1733 = vmatprep.subr.bf16.mxu0 0
        %1734 = vmatpush1.bf16.msra.mxu0 0
        %1735 = vmatprep.mubr.bf16.mxu0 0
        %1736 = vmatmul.mubr.bf16.gmra.mrb[0].mxu0 %v1701
        %v1737 = vpop.f32.mrb[0].mxu0
        %v1738 = vadd.f32 %v1673, %v1737
        %v1739 = vpop.f32.mrb[0].mxu0
        %v1740 = vpop.f32.mrb[0].mxu0
        %v1741 = vpop.f32.mrb[0].mxu0
        %1742 = vdwg.mxu0
        %v1743 = vadd.f32 %v1738, %v1590
        %1744 = vst.msk [vmem:[%s655] sm:$0xff] %vm810, %v1743
        %s1745 = sand.u32 %s406, 1
        %s1746 = scalar_lea.sflag [#allocation6], %s1745
        %s1747 = sand.u32 %s406, 1
        %s1748 = smul.addr %s1747, 8
        %s1749 = scalar_lea.vmem [#allocation16], %s1748
        // Predicated region
        $region117: #{tpu_custom_call.1} parent=83 // pred_check
          %p1750 = pneg %p416
        $region118: #{tpu_custom_call.1} parent=83 // pred_check_branch
          %1752 = sbr.rel (%p1750) target = $region120
        $region119: #{tpu_custom_call.1} parent=83 // pred_region
          %s1754 = ssub.s32 128, 128
          %1755 = vsyncadd %s1746, %s1754
          %s1756 = smul.addr %s40, 2
          %s1757 = sadd.s32 %s41, %s1756
          %s1758 = smul.addr %s1757, 128
          %s1759 = scalar_lea.hbm %s16, %s1758
          %s1761 = sshll.u32 %s1749, 4
          %s1762 = int_to_ptr.vmem [resolvable:$true] %s1761
          %1764 = dma.vmem_to_hbm [thread:$0]  %s1762, 128, %s1759, %s1746
        $region120: #{tpu_custom_call.1} parent=83 // pred_fallthru
          _
      $region84: #{tpu_custom_call.1} parent=5 // pred_fallthru
        _
      %p1765 = scmp.le.s32.totalorder 2, %s31
      // Predicated region
      $region121: #{tpu_custom_call.1} parent=5 // pred_check
        %p1766 = pneg %p1765
      $region122: #{tpu_custom_call.1} parent=5 // pred_check_branch
        %1768 = sbr.rel (%p1766) target = $region124
      $region123: #{tpu_custom_call.1} parent=5 // pred_region
        %s1769 = ssub.s32 %s31, 2
        // Predicated region
        $region125: #{tpu_custom_call.1} parent=123 // pred_check
          %p1770 = pneg %p422
        $region126: #{tpu_custom_call.1} parent=123 // pred_check_branch
          %1772 = sbr.rel (%p1770) target = $region128
        $region127: #{tpu_custom_call.1} parent=123 // pred_region
          %s1773 = sand.u32 %s407, 1
          %s1774 = scalar_lea.sflag [#allocation6], %s1773
          %s1775 = sand.u32 %s407, 1
          %s1776 = smul.addr %s1775, 8
          %s1777 = scalar_lea.vmem [#allocation16], %s1776
          %1778 = dma.done %s1774, 128
        $region128: #{tpu_custom_call.1} parent=123 // pred_fallthru
          _
      $region124: #{tpu_custom_call.1} parent=5 // pred_fallthru
        _
    $region6: #{tpu_custom_call.1} parent=1 // loop_footer
      %s35 = sadd.s32 1, %s31
    $region7: #{tpu_custom_call.1} parent=1 // loop_footer_branch
      %30 = sbr.rel target = $region3
    $region8: #{tpu_custom_call.1} parent=1 // loop_exit
      _
    %1779 = vsyncpa [#allocation5], 1
    %s1780 = scalar_lea.sflag [#allocation5], 1
    %1781 = vsyncpa %s1780, 1
    %1782 = vsyncpa [#allocation8], 1
    %1783 = vsyncpa [#allocation11], 1
    %1784 = vsyncpa [#allocation14], 1
    %1785 = vsyncpa [#allocation6], 1
    %s1786 = scalar_lea.sflag [#allocation6], 1
    %1787 = vsyncpa %s1786, 1

</llo_original>
